<compile_context>
chip_gen: v6e
topology: v6e:2x2x1
jax: 0.10.0
libtpu: 0.0.40
codegen_flags: <defaults>
</compile_context>

<pallas_src>
import jax
import jax.numpy as jnp
from jax.experimental import pallas as pl
from jax.experimental.pallas import tpu as pltpu


def _lstm_kernel(x_ref, w0_ref, b0_ref, wl_ref, bl_ref, wfc_ref, bfc_ref,
                 out_ref):
    Hp = wfc_ref.shape[0]           # lane-padded hidden size (multiple of 128)
    Lm1 = wl_ref.shape[0]           # number of stacked layers after layer 0

    def cell(x, w, b):
        # Fused gate projection on the MXU: (B, Din) @ (Din, 3*Hp).
        gates = jnp.dot(x, w, preferred_element_type=jnp.float32) + b
        # Lane-aligned static slices (each gate padded to Hp lanes).
        i_g = jax.nn.sigmoid(gates[:, 0 * Hp:1 * Hp])
        g_g = jnp.tanh(gates[:, 1 * Hp:2 * Hp])
        o_g = jax.nn.sigmoid(gates[:, 2 * Hp:3 * Hp])
        # c_prev == 0  ->  c = f*c_prev + i*g == i*g  (forget gate irrelevant).
        c = i_g * g_g
        # Padded lanes: gates==0 -> i=o=0.5, g=0 -> h stays exactly 0 there.
        return o_g * jnp.tanh(c)                       # (B, Hp)

    h = cell(x_ref[...], w0_ref[...], b0_ref[...])     # layer 0
    for l in range(Lm1):                               # static unroll (5 tiny steps)
        h = cell(h, wl_ref[l], bl_ref[l])              # layers 1 .. L-1

    out_ref[...] = (jnp.dot(h, wfc_ref[...], preferred_element_type=jnp.float32)
                    + bfc_ref[...]).astype(out_ref.dtype)


def lstm_network_forward(x, params):
    """x: (B, input_size); params['lstm'] = [(W_ih, W_hh, b_ih, b_hh), ...]
    in torch layout (4H, in)/(4H, H)/(4H,)/(4H,), gate order i,f,g,o;
    params['Wfc']: (out, H), params['bfc']: (out,)."""
    lstm_params = params["lstm"]
    Wfc, bfc = params["Wfc"], params["bfc"]

    B, I = x.shape
    L = len(lstm_params)
    O, H = Wfc.shape
    Hp = ((H + 127) // 128) * 128       # pad hidden to a full lane tile

    def pack(W_ih, b_ih, b_hh, din_pad):
        # Keep only gates i, g, o (torch order i,f,g,o); forget gate hits
        # c_prev == 0.  Transpose to (in, H) per gate and pad each gate to Hp
        # lanes so kernel slices are 128-aligned.
        Wt = W_ih.T.astype(jnp.float32)                 # (din, 4H)
        bias = (b_ih + b_hh).astype(jnp.float32)        # (4H,)
        Wp = jnp.zeros((din_pad, 3 * Hp), jnp.float32)
        bp = jnp.zeros((1, 3 * Hp), jnp.float32)
        for slot, gate in enumerate((0, 2, 3)):         # i, g, o
            Wp = Wp.at[:Wt.shape[0], slot * Hp:slot * Hp + H].set(
                Wt[:, gate * H:(gate + 1) * H])
            bp = bp.at[0, slot * Hp:slot * Hp + H].set(
                bias[gate * H:(gate + 1) * H])
        return Wp, bp

    # Layer 0 (input_size -> hidden).
    W_ih0, _, b_ih0, b_hh0 = lstm_params[0]
    w0, b0 = pack(W_ih0, b_ih0, b_hh0, I)

    # Layers 1 .. L-1 (hidden -> hidden), stacked.
    wl_list, bl_list = [], []
    for l in range(1, L):
        W_ih, _, b_ih, b_hh = lstm_params[l]
        Wp, bp = pack(W_ih, b_ih, b_hh, Hp)
        wl_list.append(Wp)
        bl_list.append(bp)
    wl = jnp.stack(wl_list, axis=0)                     # (L-1, Hp, 3*Hp)
    bl = jnp.stack(bl_list, axis=0)                     # (L-1, 1, 3*Hp)

    # Output head: (Hp, O) with zero rows for padded hidden lanes.
    wfc = jnp.zeros((Hp, O), jnp.float32).at[:H, :].set(Wfc.T.astype(jnp.float32))
    bfc2 = bfc.reshape(1, O).astype(jnp.float32)

    x_f32 = x.astype(jnp.float32)

    flops = (2 * B * I * 3 * Hp
             + (L - 1) * 2 * B * Hp * 3 * Hp
             + 2 * B * Hp * O
             + L * 6 * B * Hp)
    transcendentals = L * 4 * B * Hp
    bytes_accessed = 4 * (x_f32.size + w0.size + b0.size + wl.size + bl.size
                          + wfc.size + bfc2.size + B * O)

    vmem = pl.BlockSpec(memory_space=pltpu.MemorySpace.VMEM)

    out = pl.pallas_call(
        _lstm_kernel,
        out_shape=jax.ShapeDtypeStruct((B, O), jnp.float32),
        in_specs=[vmem, vmem, vmem, vmem, vmem, vmem, vmem],
        out_specs=vmem,
        compiler_params=pltpu.CompilerParams(vmem_limit_bytes=32 * 1024 * 1024),
        cost_estimate=pl.CostEstimate(flops=int(flops),
                                      transcendentals=int(transcendentals),
                                      bytes_accessed=int(bytes_accessed)),
    )(x_f32, w0, b0, wl, bl, wfc, bfc2)
    return out


def _reference(x, params):
    """Pure-JAX mirror of the exact PyTorch forward (full LSTM cell incl. the
    recurrent W_hh terms and forget gate, with h0 = c0 = 0, seq_len = 1)."""
    B = x.shape[0]
    xt = x                                              # after unsqueeze(1), t=0
    for (W_ih, W_hh, b_ih, b_hh) in params["lstm"]:
        H = W_hh.shape[1]
        h_prev = jnp.zeros((B, H), jnp.float32)
        c_prev = jnp.zeros((B, H), jnp.float32)
        gates = xt @ W_ih.T + b_ih + h_prev @ W_hh.T + b_hh
        i, f, g, o = jnp.split(gates, 4, axis=-1)
        i = jax.nn.sigmoid(i)
        f = jax.nn.sigmoid(f)
        g = jnp.tanh(g)
        o = jax.nn.sigmoid(o)
        c = f * c_prev + i * g
        xt = o * jnp.tanh(c)                            # feeds the next layer
    return xt @ params["Wfc"].T + params["bfc"]         # out[:, -1, :] -> fc


if __name__ == "__main__":
    B, INPUT, HIDDEN, LAYERS, OUT = 8, 11, 60, 6, 1     # module defaults

    key = jax.random.PRNGKey(0)
    key, kx = jax.random.split(key)
    x = jax.random.normal(kx, (B, INPUT), jnp.float32)

    scale = 1.0 / (HIDDEN ** 0.5)                       # torch default init range
    lstm_params = []
    for l in range(LAYERS):
        din = INPUT if l == 0 else HIDDEN
        key, k1, k2, k3, k4 = jax.random.split(key, 5)
        lstm_params.append((
            jax.random.uniform(k1, (4 * HIDDEN, din), jnp.float32, -scale, scale),
            jax.random.uniform(k2, (4 * HIDDEN, HIDDEN), jnp.float32, -scale, scale),
            jax.random.uniform(k3, (4 * HIDDEN,), jnp.float32, -scale, scale),
            jax.random.uniform(k4, (4 * HIDDEN,), jnp.float32, -scale, scale),
        ))
    key, k5, k6 = jax.random.split(key, 3)
    params = dict(
        lstm=lstm_params,
        Wfc=jax.random.uniform(k5, (OUT, HIDDEN), jnp.float32, -scale, scale),
        bfc=jax.random.uniform(k6, (OUT,), jnp.float32, -scale, scale),
    )

    out = jax.block_until_ready(lstm_network_forward(x, params))
    ref = _reference(x, params)

    assert out.shape == (B, OUT), out.shape
    err = float(jnp.max(jnp.abs(out - ref)))
    assert jnp.allclose(out, ref, atol=1e-5, rtol=1e-5), err

    print("KERNEL_OK")
</pallas_src>

<mosaic_0001>
module attributes {stable_mosaic.version = 11 : i64} {
  func.func @_lstm_kernel(%arg0: memref<8x11xf32, #tpu.memory_space<vmem>>, %arg1: memref<11x384xf32, #tpu.memory_space<vmem>>, %arg2: memref<1x384xf32, #tpu.memory_space<vmem>>, %arg3: memref<5x128x384xf32, #tpu.memory_space<vmem>>, %arg4: memref<5x1x384xf32, #tpu.memory_space<vmem>>, %arg5: memref<128x1xf32, #tpu.memory_space<vmem>>, %arg6: memref<1x1xf32, #tpu.memory_space<vmem>>, %arg7: memref<8x1xf32, #tpu.memory_space<vmem>>) attributes {dimension_semantics = [], scalar_prefetch = 0 : i64, scratch_operands = 0 : i64, tpu.core_type = #tpu.core_type<tc>} {
    %c0 = arith.constant 0 : index
    %c0_0 = arith.constant 0 : index
    %0 = vector.load %arg0[%c0, %c0_0] : memref<8x11xf32, #tpu.memory_space<vmem>>, vector<8x11xf32>
    %c0_1 = arith.constant 0 : index
    %c0_2 = arith.constant 0 : index
    %1 = vector.load %arg1[%c0_1, %c0_2] : memref<11x384xf32, #tpu.memory_space<vmem>>, vector<11x384xf32>
    %c0_3 = arith.constant 0 : index
    %c0_4 = arith.constant 0 : index
    %2 = vector.load %arg2[%c0_3, %c0_4] : memref<1x384xf32, #tpu.memory_space<vmem>>, vector<1x384xf32>
    %cst = arith.constant dense<0.000000e+00> : vector<8x384xf32>
    %3 = tpu.matmul %0, %1, %cst {dimension_numbers = #tpu.dot_dimension_numbers<[1], [0], [0], [1], [0, 0, 1, 1], [], []>} : vector<8x11xf32>, vector<11x384xf32>, vector<8x384xf32> -> vector<8x384xf32>
    %4 = vector.broadcast %2 : vector<1x384xf32> to vector<8x384xf32>
    %5 = arith.addf %3, %4 : vector<8x384xf32>
    %6 = vector.extract_strided_slice %5 {offsets = [0, 0], sizes = [8, 128], strides = [1, 1]} : vector<8x384xf32> to vector<8x128xf32>
    %7 = arith.negf %6 : vector<8x128xf32>
    %8 = math.exp %7 : vector<8x128xf32>
    %cst_5 = arith.constant 1.000000e+00 : f32
    %9 = vector.broadcast %cst_5 : f32 to vector<8x128xf32>
    %10 = arith.addf %9, %8 : vector<8x128xf32>
    %11 = arith.divf %9, %10 : vector<8x128xf32>
    %12 = vector.extract_strided_slice %5 {offsets = [0, 128], sizes = [8, 128], strides = [1, 1]} : vector<8x384xf32> to vector<8x128xf32>
    %13 = math.tanh %12 : vector<8x128xf32>
    %14 = vector.extract_strided_slice %5 {offsets = [0, 256], sizes = [8, 128], strides = [1, 1]} : vector<8x384xf32> to vector<8x128xf32>
    %15 = arith.negf %14 : vector<8x128xf32>
    %16 = math.exp %15 : vector<8x128xf32>
    %cst_6 = arith.constant 1.000000e+00 : f32
    %17 = vector.broadcast %cst_6 : f32 to vector<8x128xf32>
    %18 = arith.addf %17, %16 : vector<8x128xf32>
    %19 = arith.divf %17, %18 : vector<8x128xf32>
    %20 = arith.mulf %11, %13 : vector<8x128xf32>
    %21 = math.tanh %20 : vector<8x128xf32>
    %22 = arith.mulf %19, %21 : vector<8x128xf32>
    %c0_7 = arith.constant 0 : index
    %c0_8 = arith.constant 0 : index
    %c0_9 = arith.constant 0 : index
    %23 = vector.load %arg3[%c0_7, %c0_8, %c0_9] : memref<5x128x384xf32, #tpu.memory_space<vmem>>, vector<1x128x384xf32>
    %24 = vector.shape_cast %23 : vector<1x128x384xf32> to vector<128x384xf32>
    %c0_10 = arith.constant 0 : index
    %c0_11 = arith.constant 0 : index
    %c0_12 = arith.constant 0 : index
    %25 = vector.load %arg4[%c0_10, %c0_11, %c0_12] : memref<5x1x384xf32, #tpu.memory_space<vmem>>, vector<1x1x384xf32>
    %26 = vector.shape_cast %25 : vector<1x1x384xf32> to vector<1x384xf32>
    %cst_13 = arith.constant dense<0.000000e+00> : vector<8x384xf32>
    %27 = tpu.matmul %22, %24, %cst_13 {dimension_numbers = #tpu.dot_dimension_numbers<[1], [0], [0], [1], [0, 0, 1, 1], [], []>} : vector<8x128xf32>, vector<128x384xf32>, vector<8x384xf32> -> vector<8x384xf32>
    %28 = vector.broadcast %26 : vector<1x384xf32> to vector<8x384xf32>
    %29 = arith.addf %27, %28 : vector<8x384xf32>
    %30 = vector.extract_strided_slice %29 {offsets = [0, 0], sizes = [8, 128], strides = [1, 1]} : vector<8x384xf32> to vector<8x128xf32>
    %31 = arith.negf %30 : vector<8x128xf32>
    %32 = math.exp %31 : vector<8x128xf32>
    %cst_14 = arith.constant 1.000000e+00 : f32
    %33 = vector.broadcast %cst_14 : f32 to vector<8x128xf32>
    %34 = arith.addf %33, %32 : vector<8x128xf32>
    %35 = arith.divf %33, %34 : vector<8x128xf32>
    %36 = vector.extract_strided_slice %29 {offsets = [0, 128], sizes = [8, 128], strides = [1, 1]} : vector<8x384xf32> to vector<8x128xf32>
    %37 = math.tanh %36 : vector<8x128xf32>
    %38 = vector.extract_strided_slice %29 {offsets = [0, 256], sizes = [8, 128], strides = [1, 1]} : vector<8x384xf32> to vector<8x128xf32>
    %39 = arith.negf %38 : vector<8x128xf32>
    %40 = math.exp %39 : vector<8x128xf32>
    %cst_15 = arith.constant 1.000000e+00 : f32
    %41 = vector.broadcast %cst_15 : f32 to vector<8x128xf32>
    %42 = arith.addf %41, %40 : vector<8x128xf32>
    %43 = arith.divf %41, %42 : vector<8x128xf32>
    %44 = arith.mulf %35, %37 : vector<8x128xf32>
    %45 = math.tanh %44 : vector<8x128xf32>
    %46 = arith.mulf %43, %45 : vector<8x128xf32>
    %c1 = arith.constant 1 : index
    %c0_16 = arith.constant 0 : index
    %c0_17 = arith.constant 0 : index
    %47 = vector.load %arg3[%c1, %c0_16, %c0_17] : memref<5x128x384xf32, #tpu.memory_space<vmem>>, vector<1x128x384xf32>
    %48 = vector.shape_cast %47 : vector<1x128x384xf32> to vector<128x384xf32>
    %c1_18 = arith.constant 1 : index
    %c0_19 = arith.constant 0 : index
    %c0_20 = arith.constant 0 : index
    %49 = vector.load %arg4[%c1_18, %c0_19, %c0_20] : memref<5x1x384xf32, #tpu.memory_space<vmem>>, vector<1x1x384xf32>
    %50 = vector.shape_cast %49 : vector<1x1x384xf32> to vector<1x384xf32>
    %cst_21 = arith.constant dense<0.000000e+00> : vector<8x384xf32>
    %51 = tpu.matmul %46, %48, %cst_21 {dimension_numbers = #tpu.dot_dimension_numbers<[1], [0], [0], [1], [0, 0, 1, 1], [], []>} : vector<8x128xf32>, vector<128x384xf32>, vector<8x384xf32> -> vector<8x384xf32>
    %52 = vector.broadcast %50 : vector<1x384xf32> to vector<8x384xf32>
    %53 = arith.addf %51, %52 : vector<8x384xf32>
    %54 = vector.extract_strided_slice %53 {offsets = [0, 0], sizes = [8, 128], strides = [1, 1]} : vector<8x384xf32> to vector<8x128xf32>
    %55 = arith.negf %54 : vector<8x128xf32>
    %56 = math.exp %55 : vector<8x128xf32>
    %cst_22 = arith.constant 1.000000e+00 : f32
    %57 = vector.broadcast %cst_22 : f32 to vector<8x128xf32>
    %58 = arith.addf %57, %56 : vector<8x128xf32>
    %59 = arith.divf %57, %58 : vector<8x128xf32>
    %60 = vector.extract_strided_slice %53 {offsets = [0, 128], sizes = [8, 128], strides = [1, 1]} : vector<8x384xf32> to vector<8x128xf32>
    %61 = math.tanh %60 : vector<8x128xf32>
    %62 = vector.extract_strided_slice %53 {offsets = [0, 256], sizes = [8, 128], strides = [1, 1]} : vector<8x384xf32> to vector<8x128xf32>
    %63 = arith.negf %62 : vector<8x128xf32>
    %64 = math.exp %63 : vector<8x128xf32>
    %cst_23 = arith.constant 1.000000e+00 : f32
    %65 = vector.broadcast %cst_23 : f32 to vector<8x128xf32>
    %66 = arith.addf %65, %64 : vector<8x128xf32>
    %67 = arith.divf %65, %66 : vector<8x128xf32>
    %68 = arith.mulf %59, %61 : vector<8x128xf32>
    %69 = math.tanh %68 : vector<8x128xf32>
    %70 = arith.mulf %67, %69 : vector<8x128xf32>
    %c2 = arith.constant 2 : index
    %c0_24 = arith.constant 0 : index
    %c0_25 = arith.constant 0 : index
    %71 = vector.load %arg3[%c2, %c0_24, %c0_25] : memref<5x128x384xf32, #tpu.memory_space<vmem>>, vector<1x128x384xf32>
    %72 = vector.shape_cast %71 : vector<1x128x384xf32> to vector<128x384xf32>
    %c2_26 = arith.constant 2 : index
    %c0_27 = arith.constant 0 : index
    %c0_28 = arith.constant 0 : index
    %73 = vector.load %arg4[%c2_26, %c0_27, %c0_28] : memref<5x1x384xf32, #tpu.memory_space<vmem>>, vector<1x1x384xf32>
    %74 = vector.shape_cast %73 : vector<1x1x384xf32> to vector<1x384xf32>
    %cst_29 = arith.constant dense<0.000000e+00> : vector<8x384xf32>
    %75 = tpu.matmul %70, %72, %cst_29 {dimension_numbers = #tpu.dot_dimension_numbers<[1], [0], [0], [1], [0, 0, 1, 1], [], []>} : vector<8x128xf32>, vector<128x384xf32>, vector<8x384xf32> -> vector<8x384xf32>
    %76 = vector.broadcast %74 : vector<1x384xf32> to vector<8x384xf32>
    %77 = arith.addf %75, %76 : vector<8x384xf32>
    %78 = vector.extract_strided_slice %77 {offsets = [0, 0], sizes = [8, 128], strides = [1, 1]} : vector<8x384xf32> to vector<8x128xf32>
    %79 = arith.negf %78 : vector<8x128xf32>
    %80 = math.exp %79 : vector<8x128xf32>
    %cst_30 = arith.constant 1.000000e+00 : f32
    %81 = vector.broadcast %cst_30 : f32 to vector<8x128xf32>
    %82 = arith.addf %81, %80 : vector<8x128xf32>
    %83 = arith.divf %81, %82 : vector<8x128xf32>
    %84 = vector.extract_strided_slice %77 {offsets = [0, 128], sizes = [8, 128], strides = [1, 1]} : vector<8x384xf32> to vector<8x128xf32>
    %85 = math.tanh %84 : vector<8x128xf32>
    %86 = vector.extract_strided_slice %77 {offsets = [0, 256], sizes = [8, 128], strides = [1, 1]} : vector<8x384xf32> to vector<8x128xf32>
    %87 = arith.negf %86 : vector<8x128xf32>
    %88 = math.exp %87 : vector<8x128xf32>
    %cst_31 = arith.constant 1.000000e+00 : f32
    %89 = vector.broadcast %cst_31 : f32 to vector<8x128xf32>
    %90 = arith.addf %89, %88 : vector<8x128xf32>
    %91 = arith.divf %89, %90 : vector<8x128xf32>
    %92 = arith.mulf %83, %85 : vector<8x128xf32>
    %93 = math.tanh %92 : vector<8x128xf32>
    %94 = arith.mulf %91, %93 : vector<8x128xf32>
    %c3 = arith.constant 3 : index
    %c0_32 = arith.constant 0 : index
    %c0_33 = arith.constant 0 : index
    %95 = vector.load %arg3[%c3, %c0_32, %c0_33] : memref<5x128x384xf32, #tpu.memory_space<vmem>>, vector<1x128x384xf32>
    %96 = vector.shape_cast %95 : vector<1x128x384xf32> to vector<128x384xf32>
    %c3_34 = arith.constant 3 : index
    %c0_35 = arith.constant 0 : index
    %c0_36 = arith.constant 0 : index
    %97 = vector.load %arg4[%c3_34, %c0_35, %c0_36] : memref<5x1x384xf32, #tpu.memory_space<vmem>>, vector<1x1x384xf32>
    %98 = vector.shape_cast %97 : vector<1x1x384xf32> to vector<1x384xf32>
    %cst_37 = arith.constant dense<0.000000e+00> : vector<8x384xf32>
    %99 = tpu.matmul %94, %96, %cst_37 {dimension_numbers = #tpu.dot_dimension_numbers<[1], [0], [0], [1], [0, 0, 1, 1], [], []>} : vector<8x128xf32>, vector<128x384xf32>, vector<8x384xf32> -> vector<8x384xf32>
    %100 = vector.broadcast %98 : vector<1x384xf32> to vector<8x384xf32>
    %101 = arith.addf %99, %100 : vector<8x384xf32>
    %102 = vector.extract_strided_slice %101 {offsets = [0, 0], sizes = [8, 128], strides = [1, 1]} : vector<8x384xf32> to vector<8x128xf32>
    %103 = arith.negf %102 : vector<8x128xf32>
    %104 = math.exp %103 : vector<8x128xf32>
    %cst_38 = arith.constant 1.000000e+00 : f32
    %105 = vector.broadcast %cst_38 : f32 to vector<8x128xf32>
    %106 = arith.addf %105, %104 : vector<8x128xf32>
    %107 = arith.divf %105, %106 : vector<8x128xf32>
    %108 = vector.extract_strided_slice %101 {offsets = [0, 128], sizes = [8, 128], strides = [1, 1]} : vector<8x384xf32> to vector<8x128xf32>
    %109 = math.tanh %108 : vector<8x128xf32>
    %110 = vector.extract_strided_slice %101 {offsets = [0, 256], sizes = [8, 128], strides = [1, 1]} : vector<8x384xf32> to vector<8x128xf32>
    %111 = arith.negf %110 : vector<8x128xf32>
    %112 = math.exp %111 : vector<8x128xf32>
    %cst_39 = arith.constant 1.000000e+00 : f32
    %113 = vector.broadcast %cst_39 : f32 to vector<8x128xf32>
    %114 = arith.addf %113, %112 : vector<8x128xf32>
    %115 = arith.divf %113, %114 : vector<8x128xf32>
    %116 = arith.mulf %107, %109 : vector<8x128xf32>
    %117 = math.tanh %116 : vector<8x128xf32>
    %118 = arith.mulf %115, %117 : vector<8x128xf32>
    %c4 = arith.constant 4 : index
    %c0_40 = arith.constant 0 : index
    %c0_41 = arith.constant 0 : index
    %119 = vector.load %arg3[%c4, %c0_40, %c0_41] : memref<5x128x384xf32, #tpu.memory_space<vmem>>, vector<1x128x384xf32>
    %120 = vector.shape_cast %119 : vector<1x128x384xf32> to vector<128x384xf32>
    %c4_42 = arith.constant 4 : index
    %c0_43 = arith.constant 0 : index
    %c0_44 = arith.constant 0 : index
    %121 = vector.load %arg4[%c4_42, %c0_43, %c0_44] : memref<5x1x384xf32, #tpu.memory_space<vmem>>, vector<1x1x384xf32>
    %122 = vector.shape_cast %121 : vector<1x1x384xf32> to vector<1x384xf32>
    %cst_45 = arith.constant dense<0.000000e+00> : vector<8x384xf32>
    %123 = tpu.matmul %118, %120, %cst_45 {dimension_numbers = #tpu.dot_dimension_numbers<[1], [0], [0], [1], [0, 0, 1, 1], [], []>} : vector<8x128xf32>, vector<128x384xf32>, vector<8x384xf32> -> vector<8x384xf32>
    %124 = vector.broadcast %122 : vector<1x384xf32> to vector<8x384xf32>
    %125 = arith.addf %123, %124 : vector<8x384xf32>
    %126 = vector.extract_strided_slice %125 {offsets = [0, 0], sizes = [8, 128], strides = [1, 1]} : vector<8x384xf32> to vector<8x128xf32>
    %127 = arith.negf %126 : vector<8x128xf32>
    %128 = math.exp %127 : vector<8x128xf32>
    %cst_46 = arith.constant 1.000000e+00 : f32
    %129 = vector.broadcast %cst_46 : f32 to vector<8x128xf32>
    %130 = arith.addf %129, %128 : vector<8x128xf32>
    %131 = arith.divf %129, %130 : vector<8x128xf32>
    %132 = vector.extract_strided_slice %125 {offsets = [0, 128], sizes = [8, 128], strides = [1, 1]} : vector<8x384xf32> to vector<8x128xf32>
    %133 = math.tanh %132 : vector<8x128xf32>
    %134 = vector.extract_strided_slice %125 {offsets = [0, 256], sizes = [8, 128], strides = [1, 1]} : vector<8x384xf32> to vector<8x128xf32>
    %135 = arith.negf %134 : vector<8x128xf32>
    %136 = math.exp %135 : vector<8x128xf32>
    %cst_47 = arith.constant 1.000000e+00 : f32
    %137 = vector.broadcast %cst_47 : f32 to vector<8x128xf32>
    %138 = arith.addf %137, %136 : vector<8x128xf32>
    %139 = arith.divf %137, %138 : vector<8x128xf32>
    %140 = arith.mulf %131, %133 : vector<8x128xf32>
    %141 = math.tanh %140 : vector<8x128xf32>
    %142 = arith.mulf %139, %141 : vector<8x128xf32>
    %c0_48 = arith.constant 0 : index
    %c0_49 = arith.constant 0 : index
    %143 = vector.load %arg5[%c0_48, %c0_49] : memref<128x1xf32, #tpu.memory_space<vmem>>, vector<128x1xf32>
    %cst_50 = arith.constant dense<0.000000e+00> : vector<8x1xf32>
    %144 = tpu.matmul %142, %143, %cst_50 {dimension_numbers = #tpu.dot_dimension_numbers<[1], [0], [0], [1], [0, 0, 1, 1], [], []>} : vector<8x128xf32>, vector<128x1xf32>, vector<8x1xf32> -> vector<8x1xf32>
    %c0_51 = arith.constant 0 : index
    %c0_52 = arith.constant 0 : index
    %145 = vector.load %arg6[%c0_51, %c0_52] : memref<1x1xf32, #tpu.memory_space<vmem>>, vector<1x1xf32>
    %146 = vector.broadcast %145 : vector<1x1xf32> to vector<8x1xf32>
    %147 = arith.addf %144, %146 : vector<8x1xf32>
    %c0_53 = arith.constant 0 : index
    %c0_54 = arith.constant 0 : index
    %148 = vector.load %arg7[%c0_53, %c0_54] : memref<8x1xf32, #tpu.memory_space<vmem>>, vector<8x1xf32>
    tpu.vector_store %arg7[%c0_53, %c0_54], %147 {strides = array<i32>} : memref<8x1xf32, #tpu.memory_space<vmem>>, vector<8x1xf32>,
    return
  }
}

</mosaic_0001>

<llo_original>
// kernel: tpu_custom_call.1
$region0: #{tpu_custom_call.1}
  #allocation0 [shape = 'u32[]', space=smem, size = 0x4, offset = 0x4, fixed_abs, tag = 'smem constant byte address 0x4 - core index']
  #allocation1 [shape = 'u32[144,128]{1,0:T(1,128)}', space=vmem, size = 0x12000, scoped, tag = 'internal scratch']
  #allocation2 [shape = 'f32[1,1]{1,0:T(1,128)S(1)}', space=vmem, size = 0x200, scoped, tag = 'scoped memory for tpu_custom_call.1']
  %s0 = inlined_call_operand.vmem [shape: f32[8,11], index: 0, kind: input, shape index: {}]
  %s1 = inlined_call_operand.vmem [shape: f32[11,384], index: 1, kind: input, shape index: {}]
  %s2 = inlined_call_operand.vmem [shape: f32[1,384], index: 2, kind: input, shape index: {}]
  %s3 = inlined_call_operand.hbm [shape: f32[5,128,384], index: 3, kind: input, shape index: {}]
  %s4 = inlined_call_operand.vmem [shape: f32[5,1,384], index: 4, kind: input, shape index: {}]
  %s5 = inlined_call_operand.vmem [shape: f32[128,1], index: 5, kind: input, shape index: {}]
  %s6 = inlined_call_operand.<no memory space> [shape: f32[1,1], index: 6, kind: input, shape index: {}]
  %s7 = inlined_call_operand.vmem [shape: f32[8,1], index: 7, kind: output, shape index: {}]
  %s8 = sld [smem:[#allocation0]]
  $region42: #{tpu_custom_call.1} parent=0
    _
  %s10 = ssub.s32 1, %s8
  %s11 = scalar_select 0, %s10, %s8
  %v12 = vstv %s6
  %13 = vst [vmem:[#allocation2] sm:$0x1] %v12
  $region1: #{tpu_custom_call.1} parent=0
    #allocation3 [shape = 'u8[983040]{0}', space=vmem, size = 0xf0000, scoped, tag = 'input window, operand 3, single buffered']
    #allocation4 [shape = 's32[1]{0}', space=sflag, size = 0x4, scoped, tag = 'scoped memory for tpu_custom_call.1']
    %14 = vsyncpa [#allocation4], 0
    // Predicated region
    $region2: #{tpu_custom_call.1} parent=1 // pred_check
      _
    $region3: #{tpu_custom_call.1} parent=1 // pred_check_branch
      %16 = sbr.rel (0) target = $region5
    $region4: #{tpu_custom_call.1} parent=1 // pred_region
      _
    $region5: #{tpu_custom_call.1} parent=1 // pred_fallthru
      _
    // Predicated region
    $region6: #{tpu_custom_call.1} parent=1 // pred_check
      _
    $region7: #{tpu_custom_call.1} parent=1 // pred_check_branch
      %18 = sbr.rel (0) target = $region9
    $region8: #{tpu_custom_call.1} parent=1 // pred_region
      _
    $region9: #{tpu_custom_call.1} parent=1 // pred_fallthru
      _
    // Predicated region
    $region10: #{tpu_custom_call.1} parent=1 // pred_check
      _
    $region11: #{tpu_custom_call.1} parent=1 // pred_check_branch
      %20 = sbr.rel (0) target = $region13
    $region12: #{tpu_custom_call.1} parent=1 // pred_region
      _
    $region13: #{tpu_custom_call.1} parent=1 // pred_fallthru
      _
    // Predicated region
    $region14: #{tpu_custom_call.1} parent=1 // pred_check
      _
    $region15: #{tpu_custom_call.1} parent=1 // pred_check_branch
      %22 = sbr.rel (0) target = $region17
    $region16: #{tpu_custom_call.1} parent=1 // pred_region
      %s24 = ssub.s32 30720, 30720
      %25 = vsyncadd [#allocation4], %s24
      %s26 = sshll.u32 [#allocation3], 4
      %s27 = int_to_ptr.vmem [resolvable:$true] %s26
      %32 = dma.hbm_to_vmem [thread:$0]  %s3, 30720, %s27, [#allocation4], 384, 384, 24
    $region17: #{tpu_custom_call.1} parent=1 // pred_fallthru
      _
    // Predicated region
    $region18: #{tpu_custom_call.1} parent=1 // pred_check
      _
    $region19: #{tpu_custom_call.1} parent=1 // pred_check_branch
      %34 = sbr.rel (0) target = $region21
    $region20: #{tpu_custom_call.1} parent=1 // pred_region
      _
    $region21: #{tpu_custom_call.1} parent=1 // pred_fallthru
      _
    // Predicated region
    $region22: #{tpu_custom_call.1} parent=1 // pred_check
      _
    $region23: #{tpu_custom_call.1} parent=1 // pred_check_branch
      %36 = sbr.rel (0) target = $region25
    $region24: #{tpu_custom_call.1} parent=1 // pred_region
      _
    $region25: #{tpu_custom_call.1} parent=1 // pred_fallthru
      _
    // Predicated region
    $region26: #{tpu_custom_call.1} parent=1 // pred_check
      _
    $region27: #{tpu_custom_call.1} parent=1 // pred_check_branch
      %38 = sbr.rel (0) target = $region29
    $region28: #{tpu_custom_call.1} parent=1 // pred_region
      _
    $region29: #{tpu_custom_call.1} parent=1 // pred_fallthru
      _
    // Predicated region
    $region30: #{tpu_custom_call.1} parent=1 // pred_check
      _
    $region31: #{tpu_custom_call.1} parent=1 // pred_check_branch
      %40 = sbr.rel (0) target = $region33
    $region32: #{tpu_custom_call.1} parent=1 // pred_region
      %41 = dma.done [#allocation4], 30720
    $region33: #{tpu_custom_call.1} parent=1 // pred_fallthru
      _
    %v42 = vld [vmem:[%s0] sm:$0xff]
    %v43 = vld [vmem:[%s1] sm:$0xff]
    %v44 = vld [vmem:[%s1 + $0x8] sm:$0xff]
    %v45 = vld [vmem:[%s1 + $0x10] sm:$0xff]
    %v46 = vld [vmem:[%s1 + $0x18] sm:$0x7]
    %v47 = vld [vmem:[%s1 + $0x20] sm:$0x7]
    %v48 = vld [vmem:[%s1 + $0x28] sm:$0x7]
    %v49 = vld [vmem:[%s2] sm:$0x7]
    %v51 = vlaneseq
    %v52 = vshrl.u32 %v51, 7
    %v53 = vsub.s32 0, %v52
    %v54 = vrot.slane %v49, %v53
    %v55 = vlaneseq
    %v56 = vshrl.u32 %v55, 7
    %v57 = vsub.s32 1, %v56
    %v58 = vrot.slane %v49, %v57
    %v59 = vlaneseq
    %v60 = vshrl.u32 %v59, 7
    %v61 = vsub.s32 2, %v60
    %v62 = vrot.slane %v49, %v61
    %vm66 = vcmask 89088
    %v68 = vsel %vm66, %v42, 0
    %vm70 = vcmask 1042432
    %v72 = vsel %vm70, %v46, 0
    %v75 = vsel %vm70, %v47, 0
    %v78 = vsel %vm70, %v48, 0
    %80 = vmatprep.subr.mxu0 0.0
    %81 = vmatpush1.msra.mxu0 0.0
    %82 = vmatprep.subr.mxu0 0.0
    %83 = vmatpush1.msra.mxu0 0.0
    %84 = vmatprep.subr.mxu0 0.0
    %85 = vmatpush1.msra.mxu0 0.0
    %86 = vmatprep.subr.mxu0 0.0
    %87 = vmatpush1.msra.mxu0 0.0
    %88 = vmatprep.subr.mxu0 0.0
    %89 = vmatpush1.msra.mxu0 0.0
    %90 = vmatprep.subr.mxu0 0.0
    %91 = vmatpush1.msra.mxu0 0.0
    %92 = vmatprep.subr.mxu0 0.0
    %93 = vmatpush1.msra.mxu0 0.0
    %94 = vmatprep.subr.mxu0 0.0
    %95 = vmatpush1.msra.mxu0 0.0
    %96 = vmatprep.subr.mxu0 0.0
    %97 = vmatpush1.msra.mxu0 0.0
    %98 = vmatprep.subr.mxu0 0.0
    %99 = vmatpush1.msra.mxu0 0.0
    %100 = vmatprep.subr.mxu0 0.0
    %101 = vmatpush1.msra.mxu0 0.0
    %102 = vmatprep.subr.mxu0 0.0
    %103 = vmatpush1.msra.mxu0 0.0
    %104 = vmatprep.subr.mxu0 0.0
    %105 = vmatpush1.msra.mxu0 0.0
    %106 = vmatprep.subr.mxu0 0.0
    %107 = vmatpush1.msra.mxu0 0.0
    %108 = vmatprep.subr.mxu0 %v75
    %109 = vmatpush1.msra.mxu0 %v72
    %110 = vmatprep.subr.mxu0 %v44
    %111 = vmatpush1.msra.mxu0 %v43
    %112 = vmatprep.subr.mxu0 0.0
    %113 = vmatpush2.msra.mxu0 0.0
    %114 = vmatprep.subr.mxu0 0.0
    %115 = vmatpush2.msra.mxu0 0.0
    %116 = vmatprep.subr.mxu0 0.0
    %117 = vmatpush2.msra.mxu0 0.0
    %118 = vmatprep.subr.mxu0 0.0
    %119 = vmatpush2.msra.mxu0 0.0
    %120 = vmatprep.subr.mxu0 0.0
    %121 = vmatpush2.msra.mxu0 0.0
    %122 = vmatprep.subr.mxu0 0.0
    %123 = vmatpush2.msra.mxu0 0.0
    %124 = vmatprep.subr.mxu0 0.0
    %125 = vmatpush2.msra.mxu0 0.0
    %126 = vmatprep.subr.mxu0 0.0
    %127 = vmatpush2.msra.mxu0 0.0
    %128 = vmatprep.subr.mxu0 0.0
    %129 = vmatpush2.msra.mxu0 0.0
    %130 = vmatprep.subr.mxu0 0.0
    %131 = vmatpush2.msra.mxu0 0.0
    %132 = vmatprep.subr.mxu0 0.0
    %133 = vmatpush2.msra.mxu0 0.0
    %134 = vmatprep.subr.mxu0 0.0
    %135 = vmatpush2.msra.mxu0 0.0
    %136 = vmatprep.subr.mxu0 0.0
    %137 = vmatpush2.msra.mxu0 0.0
    %138 = vmatprep.subr.mxu0 0.0
    %139 = vmatpush2.msra.mxu0 0.0
    %140 = vmatprep.subr.mxu0 0.0
    %141 = vmatpush2.msra.mxu0 0.0
    %142 = vmatprep.subr.mxu0 0.0
    %143 = vmatpush2.msra.mxu0 0.0
    %144 = vmatprep.mubr.f32.mxu0 0.0
    %145 = vmatmul.mubr.f32.gmra.mxu0 %v68
    %v146 = vpop.f32.mrf.mxu0
    %v147 = vadd.f32 %v54, %v146
    %v148 = vpop.f32.mrf.mxu0
    %v149 = vadd.f32 %v58, %v148
    %150 = vdwg.mxu0
    %151 = vmatprep.subr.mxu0 0.0
    %152 = vmatpush1.msra.mxu0 0.0
    %153 = vmatprep.subr.mxu0 0.0
    %154 = vmatpush1.msra.mxu0 0.0
    %155 = vmatprep.subr.mxu0 0.0
    %156 = vmatpush1.msra.mxu0 0.0
    %157 = vmatprep.subr.mxu0 0.0
    %158 = vmatpush1.msra.mxu0 0.0
    %159 = vmatprep.subr.mxu0 0.0
    %160 = vmatpush1.msra.mxu0 0.0
    %161 = vmatprep.subr.mxu0 0.0
    %162 = vmatpush1.msra.mxu0 0.0
    %163 = vmatprep.subr.mxu0 0.0
    %164 = vmatpush1.msra.mxu0 0.0
    %165 = vmatprep.subr.mxu0 0.0
    %166 = vmatpush1.msra.mxu0 0.0
    %167 = vmatprep.subr.mxu0 0.0
    %168 = vmatpush1.msra.mxu0 0.0
    %169 = vmatprep.subr.mxu0 0.0
    %170 = vmatpush1.msra.mxu0 0.0
    %171 = vmatprep.subr.mxu0 0.0
    %172 = vmatpush1.msra.mxu0 0.0
    %173 = vmatprep.subr.mxu0 0.0
    %174 = vmatpush1.msra.mxu0 0.0
    %175 = vmatprep.subr.mxu0 0.0
    %176 = vmatpush1.msra.mxu0 0.0
    %177 = vmatprep.subr.mxu0 0.0
    %178 = vmatpush1.msra.mxu0 0.0
    %179 = vmatprep.subr.mxu0 0.0
    %180 = vmatpush1.msra.mxu0 %v78
    %181 = vmatprep.subr.mxu0 0.0
    %182 = vmatpush1.msra.mxu0 %v45
    %183 = vmatprep.subr.mxu0 0.0
    %184 = vmatpush2.msra.mxu0 0.0
    %185 = vmatprep.subr.mxu0 0.0
    %186 = vmatpush2.msra.mxu0 0.0
    %187 = vmatprep.subr.mxu0 0.0
    %188 = vmatpush2.msra.mxu0 0.0
    %189 = vmatprep.subr.mxu0 0.0
    %190 = vmatpush2.msra.mxu0 0.0
    %191 = vmatprep.subr.mxu0 0.0
    %192 = vmatpush2.msra.mxu0 0.0
    %193 = vmatprep.subr.mxu0 0.0
    %194 = vmatpush2.msra.mxu0 0.0
    %195 = vmatprep.subr.mxu0 0.0
    %196 = vmatpush2.msra.mxu0 0.0
    %197 = vmatprep.subr.mxu0 0.0
    %198 = vmatpush2.msra.mxu0 0.0
    %199 = vmatprep.subr.mxu0 0.0
    %200 = vmatpush2.msra.mxu0 0.0
    %201 = vmatprep.subr.mxu0 0.0
    %202 = vmatpush2.msra.mxu0 0.0
    %203 = vmatprep.subr.mxu0 0.0
    %204 = vmatpush2.msra.mxu0 0.0
    %205 = vmatprep.subr.mxu0 0.0
    %206 = vmatpush2.msra.mxu0 0.0
    %207 = vmatprep.subr.mxu0 0.0
    %208 = vmatpush2.msra.mxu0 0.0
    %209 = vmatprep.subr.mxu0 0.0
    %210 = vmatpush2.msra.mxu0 0.0
    %211 = vmatprep.subr.mxu0 0.0
    %212 = vmatpush2.msra.mxu0 0.0
    %213 = vmatprep.subr.mxu0 0.0
    %214 = vmatpush2.msra.mxu0 0.0
    %215 = vmatprep.mubr.f32.mxu0 0.0
    %216 = vmatmul.mubr.f32.gmra.mxu0 %v68
    %v217 = vpop.f32.mrf.mxu0
    %v218 = vadd.f32 %v62, %v217
    %v219 = vpop.f32.mrf.mxu0
    %220 = vdwg.mxu0
    %v221 = vxor.u32 %v147, 2147483648
    %v222 = vmul.f32 %v221, 1.442695
    %v223 = vpow.pop %v222
    %v224 = vadd.f32 %v223, 1.0
    %v225 = vrcp.pop %v224
    %v226 = vmul.f32 1.0, %v225
    %v227 = vtanh.pop %v149
    %v228 = vxor.u32 %v218, 2147483648
    %v229 = vmul.f32 %v228, 1.442695
    %v230 = vpow.pop %v229
    %v231 = vadd.f32 %v230, 1.0
    %v232 = vrcp.pop %v231
    %v233 = vmul.f32 1.0, %v232
    %v234 = vmul.f32 %v226, %v227
    %v235 = vtanh.pop %v234
    %v236 = vmul.f32 %v233, %v235
    %v237 = vld [vmem:[#allocation3] sm:$0xff]
    %v238 = vld [vmem:[#allocation3 + $0x8] sm:$0xff]
    %v239 = vld [vmem:[#allocation3 + $0x10] sm:$0xff]
    %v240 = vld [vmem:[#allocation3 + $0x18] sm:$0xff]
    %v241 = vld [vmem:[#allocation3 + $0x20] sm:$0xff]
    %v242 = vld [vmem:[#allocation3 + $0x28] sm:$0xff]
    %v243 = vld [vmem:[#allocation3 + $0x30] sm:$0xff]
    %v244 = vld [vmem:[#allocation3 + $0x38] sm:$0xff]
    %v245 = vld [vmem:[#allocation3 + $0x40] sm:$0xff]
    %v246 = vld [vmem:[#allocation3 + $0x48] sm:$0xff]
    %v247 = vld [vmem:[#allocation3 + $0x50] sm:$0xff]
    %v248 = vld [vmem:[#allocation3 + $0x58] sm:$0xff]
    %v249 = vld [vmem:[#allocation3 + $0x60] sm:$0xff]
    %v250 = vld [vmem:[#allocation3 + $0x68] sm:$0xff]
    %v251 = vld [vmem:[#allocation3 + $0x70] sm:$0xff]
    %v252 = vld [vmem:[#allocation3 + $0x78] sm:$0xff]
    %v253 = vld [vmem:[#allocation3 + $0x80] sm:$0xff]
    %v254 = vld [vmem:[#allocation3 + $0x88] sm:$0xff]
    %v255 = vld [vmem:[#allocation3 + $0x90] sm:$0xff]
    %v256 = vld [vmem:[#allocation3 + $0x98] sm:$0xff]
    %v257 = vld [vmem:[#allocation3 + $0xa0] sm:$0xff]
    %v258 = vld [vmem:[#allocation3 + $0xa8] sm:$0xff]
    %v259 = vld [vmem:[#allocation3 + $0xb0] sm:$0xff]
    %v260 = vld [vmem:[#allocation3 + $0xb8] sm:$0xff]
    %v261 = vld [vmem:[#allocation3 + $0xc0] sm:$0xff]
    %v262 = vld [vmem:[#allocation3 + $0xc8] sm:$0xff]
    %v263 = vld [vmem:[#allocation3 + $0xd0] sm:$0xff]
    %v264 = vld [vmem:[#allocation3 + $0xd8] sm:$0xff]
    %v265 = vld [vmem:[#allocation3 + $0xe0] sm:$0xff]
    %v266 = vld [vmem:[#allocation3 + $0xe8] sm:$0xff]
    %v267 = vld [vmem:[#allocation3 + $0xf0] sm:$0xff]
    %v268 = vld [vmem:[#allocation3 + $0xf8] sm:$0xff]
    %v269 = vld [vmem:[#allocation3 + $0x100] sm:$0xff]
    %v270 = vld [vmem:[#allocation3 + $0x108] sm:$0xff]
    %v271 = vld [vmem:[#allocation3 + $0x110] sm:$0xff]
    %v272 = vld [vmem:[#allocation3 + $0x118] sm:$0xff]
    %v273 = vld [vmem:[#allocation3 + $0x120] sm:$0xff]
    %v274 = vld [vmem:[#allocation3 + $0x128] sm:$0xff]
    %v275 = vld [vmem:[#allocation3 + $0x130] sm:$0xff]
    %v276 = vld [vmem:[#allocation3 + $0x138] sm:$0xff]
    %v277 = vld [vmem:[#allocation3 + $0x140] sm:$0xff]
    %v278 = vld [vmem:[#allocation3 + $0x148] sm:$0xff]
    %v279 = vld [vmem:[#allocation3 + $0x150] sm:$0xff]
    %v280 = vld [vmem:[#allocation3 + $0x158] sm:$0xff]
    %v281 = vld [vmem:[#allocation3 + $0x160] sm:$0xff]
    %v282 = vld [vmem:[#allocation3 + $0x168] sm:$0xff]
    %v283 = vld [vmem:[#allocation3 + $0x170] sm:$0xff]
    %v284 = vld [vmem:[#allocation3 + $0x178] sm:$0xff]
    %v285 = vld [vmem:[%s4] sm:$0x7]
    %v287 = vlaneseq
    %v288 = vshrl.u32 %v287, 7
    %v289 = vsub.s32 0, %v288
    %v290 = vrot.slane %v285, %v289
    %v291 = vlaneseq
    %v292 = vshrl.u32 %v291, 7
    %v293 = vsub.s32 1, %v292
    %v294 = vrot.slane %v285, %v293
    %v295 = vlaneseq
    %v296 = vshrl.u32 %v295, 7
    %v297 = vsub.s32 2, %v296
    %v298 = vrot.slane %v285, %v297
    %302 = vmatprep.subr.mxu0 %v283
    %303 = vmatpush1.msra.mxu0 %v282
    %304 = vmatprep.subr.mxu0 %v280
    %305 = vmatpush1.msra.mxu0 %v279
    %306 = vmatprep.subr.mxu0 %v277
    %307 = vmatpush1.msra.mxu0 %v276
    %308 = vmatprep.subr.mxu0 %v274
    %309 = vmatpush1.msra.mxu0 %v273
    %310 = vmatprep.subr.mxu0 %v271
    %311 = vmatpush1.msra.mxu0 %v270
    %312 = vmatprep.subr.mxu0 %v268
    %313 = vmatpush1.msra.mxu0 %v267
    %314 = vmatprep.subr.mxu0 %v265
    %315 = vmatpush1.msra.mxu0 %v264
    %316 = vmatprep.subr.mxu0 %v262
    %317 = vmatpush1.msra.mxu0 %v261
    %318 = vmatprep.subr.mxu0 %v259
    %319 = vmatpush1.msra.mxu0 %v258
    %320 = vmatprep.subr.mxu0 %v256
    %321 = vmatpush1.msra.mxu0 %v255
    %322 = vmatprep.subr.mxu0 %v253
    %323 = vmatpush1.msra.mxu0 %v252
    %324 = vmatprep.subr.mxu0 %v250
    %325 = vmatpush1.msra.mxu0 %v249
    %326 = vmatprep.subr.mxu0 %v247
    %327 = vmatpush1.msra.mxu0 %v246
    %328 = vmatprep.subr.mxu0 %v244
    %329 = vmatpush1.msra.mxu0 %v243
    %330 = vmatprep.subr.mxu0 %v241
    %331 = vmatpush1.msra.mxu0 %v240
    %332 = vmatprep.subr.mxu0 %v238
    %333 = vmatpush1.msra.mxu0 %v237
    %334 = vmatprep.subr.mxu0 0.0
    %335 = vmatpush2.msra.mxu0 0.0
    %336 = vmatprep.subr.mxu0 0.0
    %337 = vmatpush2.msra.mxu0 0.0
    %338 = vmatprep.subr.mxu0 0.0
    %339 = vmatpush2.msra.mxu0 0.0
    %340 = vmatprep.subr.mxu0 0.0
    %341 = vmatpush2.msra.mxu0 0.0
    %342 = vmatprep.subr.mxu0 0.0
    %343 = vmatpush2.msra.mxu0 0.0
    %344 = vmatprep.subr.mxu0 0.0
    %345 = vmatpush2.msra.mxu0 0.0
    %346 = vmatprep.subr.mxu0 0.0
    %347 = vmatpush2.msra.mxu0 0.0
    %348 = vmatprep.subr.mxu0 0.0
    %349 = vmatpush2.msra.mxu0 0.0
    %350 = vmatprep.subr.mxu0 0.0
    %351 = vmatpush2.msra.mxu0 0.0
    %352 = vmatprep.subr.mxu0 0.0
    %353 = vmatpush2.msra.mxu0 0.0
    %354 = vmatprep.subr.mxu0 0.0
    %355 = vmatpush2.msra.mxu0 0.0
    %356 = vmatprep.subr.mxu0 0.0
    %357 = vmatpush2.msra.mxu0 0.0
    %358 = vmatprep.subr.mxu0 0.0
    %359 = vmatpush2.msra.mxu0 0.0
    %360 = vmatprep.subr.mxu0 0.0
    %361 = vmatpush2.msra.mxu0 0.0
    %362 = vmatprep.subr.mxu0 0.0
    %363 = vmatpush2.msra.mxu0 0.0
    %364 = vmatprep.subr.mxu0 0.0
    %365 = vmatpush2.msra.mxu0 0.0
    %366 = vmatprep.mubr.f32.mxu0 0.0
    %367 = vmatmul.mubr.f32.gmra.mxu0 %v236
    %v368 = vpop.f32.mrf.mxu0
    %v369 = vadd.f32 %v290, %v368
    %v370 = vpop.f32.mrf.mxu0
    %v371 = vadd.f32 %v294, %v370
    %372 = vdwg.mxu0
    %373 = vmatprep.subr.mxu0 0.0
    %374 = vmatpush1.msra.mxu0 %v284
    %375 = vmatprep.subr.mxu0 0.0
    %376 = vmatpush1.msra.mxu0 %v281
    %377 = vmatprep.subr.mxu0 0.0
    %378 = vmatpush1.msra.mxu0 %v278
    %379 = vmatprep.subr.mxu0 0.0
    %380 = vmatpush1.msra.mxu0 %v275
    %381 = vmatprep.subr.mxu0 0.0
    %382 = vmatpush1.msra.mxu0 %v272
    %383 = vmatprep.subr.mxu0 0.0
    %384 = vmatpush1.msra.mxu0 %v269
    %385 = vmatprep.subr.mxu0 0.0
    %386 = vmatpush1.msra.mxu0 %v266
    %387 = vmatprep.subr.mxu0 0.0
    %388 = vmatpush1.msra.mxu0 %v263
    %389 = vmatprep.subr.mxu0 0.0
    %390 = vmatpush1.msra.mxu0 %v260
    %391 = vmatprep.subr.mxu0 0.0
    %392 = vmatpush1.msra.mxu0 %v257
    %393 = vmatprep.subr.mxu0 0.0
    %394 = vmatpush1.msra.mxu0 %v254
    %395 = vmatprep.subr.mxu0 0.0
    %396 = vmatpush1.msra.mxu0 %v251
    %397 = vmatprep.subr.mxu0 0.0
    %398 = vmatpush1.msra.mxu0 %v248
    %399 = vmatprep.subr.mxu0 0.0
    %400 = vmatpush1.msra.mxu0 %v245
    %401 = vmatprep.subr.mxu0 0.0
    %402 = vmatpush1.msra.mxu0 %v242
    %403 = vmatprep.subr.mxu0 0.0
    %404 = vmatpush1.msra.mxu0 %v239
    %405 = vmatprep.subr.mxu0 0.0
    %406 = vmatpush2.msra.mxu0 0.0
    %407 = vmatprep.subr.mxu0 0.0
    %408 = vmatpush2.msra.mxu0 0.0
    %409 = vmatprep.subr.mxu0 0.0
    %410 = vmatpush2.msra.mxu0 0.0
    %411 = vmatprep.subr.mxu0 0.0
    %412 = vmatpush2.msra.mxu0 0.0
    %413 = vmatprep.subr.mxu0 0.0
    %414 = vmatpush2.msra.mxu0 0.0
    %415 = vmatprep.subr.mxu0 0.0
    %416 = vmatpush2.msra.mxu0 0.0
    %417 = vmatprep.subr.mxu0 0.0
    %418 = vmatpush2.msra.mxu0 0.0
    %419 = vmatprep.subr.mxu0 0.0
    %420 = vmatpush2.msra.mxu0 0.0
    %421 = vmatprep.subr.mxu0 0.0
    %422 = vmatpush2.msra.mxu0 0.0
    %423 = vmatprep.subr.mxu0 0.0
    %424 = vmatpush2.msra.mxu0 0.0
    %425 = vmatprep.subr.mxu0 0.0
    %426 = vmatpush2.msra.mxu0 0.0
    %427 = vmatprep.subr.mxu0 0.0
    %428 = vmatpush2.msra.mxu0 0.0
    %429 = vmatprep.subr.mxu0 0.0
    %430 = vmatpush2.msra.mxu0 0.0
    %431 = vmatprep.subr.mxu0 0.0
    %432 = vmatpush2.msra.mxu0 0.0
    %433 = vmatprep.subr.mxu0 0.0
    %434 = vmatpush2.msra.mxu0 0.0
    %435 = vmatprep.subr.mxu0 0.0
    %436 = vmatpush2.msra.mxu0 0.0
    %437 = vmatprep.mubr.f32.mxu0 0.0
    %438 = vmatmul.mubr.f32.gmra.mxu0 %v236
    %v439 = vpop.f32.mrf.mxu0
    %v440 = vadd.f32 %v298, %v439
    %v441 = vpop.f32.mrf.mxu0
    %442 = vdwg.mxu0
    %v443 = vxor.u32 %v369, 2147483648
    %v444 = vmul.f32 %v443, 1.442695
    %v445 = vpow.pop %v444
    %v446 = vadd.f32 %v445, 1.0
    %v447 = vrcp.pop %v446
    %v448 = vmul.f32 1.0, %v447
    %v449 = vtanh.pop %v371
    %v450 = vxor.u32 %v440, 2147483648
    %v451 = vmul.f32 %v450, 1.442695
    %v452 = vpow.pop %v451
    %v453 = vadd.f32 %v452, 1.0
    %v454 = vrcp.pop %v453
    %v455 = vmul.f32 1.0, %v454
    %v456 = vmul.f32 %v448, %v449
    %v457 = vtanh.pop %v456
    %v458 = vmul.f32 %v455, %v457
    %s459 = scalar_lea.vmem [#allocation3], 384
    %v460 = vld [vmem:[%s459] sm:$0xff]
    %v461 = vld [vmem:[%s459 + $0x8] sm:$0xff]
    %v462 = vld [vmem:[%s459 + $0x10] sm:$0xff]
    %v463 = vld [vmem:[%s459 + $0x18] sm:$0xff]
    %v464 = vld [vmem:[%s459 + $0x20] sm:$0xff]
    %v465 = vld [vmem:[%s459 + $0x28] sm:$0xff]
    %v466 = vld [vmem:[%s459 + $0x30] sm:$0xff]
    %v467 = vld [vmem:[%s459 + $0x38] sm:$0xff]
    %v468 = vld [vmem:[%s459 + $0x40] sm:$0xff]
    %v469 = vld [vmem:[%s459 + $0x48] sm:$0xff]
    %v470 = vld [vmem:[%s459 + $0x50] sm:$0xff]
    %v471 = vld [vmem:[%s459 + $0x58] sm:$0xff]
    %v472 = vld [vmem:[%s459 + $0x60] sm:$0xff]
    %v473 = vld [vmem:[%s459 + $0x68] sm:$0xff]
    %v474 = vld [vmem:[%s459 + $0x70] sm:$0xff]
    %v475 = vld [vmem:[%s459 + $0x78] sm:$0xff]
    %v476 = vld [vmem:[%s459 + $0x80] sm:$0xff]
    %v477 = vld [vmem:[%s459 + $0x88] sm:$0xff]
    %v478 = vld [vmem:[%s459 + $0x90] sm:$0xff]
    %v479 = vld [vmem:[%s459 + $0x98] sm:$0xff]
    %v480 = vld [vmem:[%s459 + $0xa0] sm:$0xff]
    %v481 = vld [vmem:[%s459 + $0xa8] sm:$0xff]
    %v482 = vld [vmem:[%s459 + $0xb0] sm:$0xff]
    %v483 = vld [vmem:[%s459 + $0xb8] sm:$0xff]
    %v484 = vld [vmem:[%s459 + $0xc0] sm:$0xff]
    %v485 = vld [vmem:[%s459 + $0xc8] sm:$0xff]
    %v486 = vld [vmem:[%s459 + $0xd0] sm:$0xff]
    %v487 = vld [vmem:[%s459 + $0xd8] sm:$0xff]
    %v488 = vld [vmem:[%s459 + $0xe0] sm:$0xff]
    %v489 = vld [vmem:[%s459 + $0xe8] sm:$0xff]
    %v490 = vld [vmem:[%s459 + $0xf0] sm:$0xff]
    %v491 = vld [vmem:[%s459 + $0xf8] sm:$0xff]
    %v492 = vld [vmem:[%s459 + $0x100] sm:$0xff]
    %v493 = vld [vmem:[%s459 + $0x108] sm:$0xff]
    %v494 = vld [vmem:[%s459 + $0x110] sm:$0xff]
    %v495 = vld [vmem:[%s459 + $0x118] sm:$0xff]
    %v496 = vld [vmem:[%s459 + $0x120] sm:$0xff]
    %v497 = vld [vmem:[%s459 + $0x128] sm:$0xff]
    %v498 = vld [vmem:[%s459 + $0x130] sm:$0xff]
    %v499 = vld [vmem:[%s459 + $0x138] sm:$0xff]
    %v500 = vld [vmem:[%s459 + $0x140] sm:$0xff]
    %v501 = vld [vmem:[%s459 + $0x148] sm:$0xff]
    %v502 = vld [vmem:[%s459 + $0x150] sm:$0xff]
    %v503 = vld [vmem:[%s459 + $0x158] sm:$0xff]
    %v504 = vld [vmem:[%s459 + $0x160] sm:$0xff]
    %v505 = vld [vmem:[%s459 + $0x168] sm:$0xff]
    %v506 = vld [vmem:[%s459 + $0x170] sm:$0xff]
    %v507 = vld [vmem:[%s459 + $0x178] sm:$0xff]
    %s508 = scalar_lea.vmem %s4, 3
    %v509 = vld [vmem:[%s508] sm:$0x7]
    %v511 = vlaneseq
    %v512 = vshrl.u32 %v511, 7
    %v513 = vsub.s32 0, %v512
    %v514 = vrot.slane %v509, %v513
    %v515 = vlaneseq
    %v516 = vshrl.u32 %v515, 7
    %v517 = vsub.s32 1, %v516
    %v518 = vrot.slane %v509, %v517
    %v519 = vlaneseq
    %v520 = vshrl.u32 %v519, 7
    %v521 = vsub.s32 2, %v520
    %v522 = vrot.slane %v509, %v521
    %526 = vmatprep.subr.mxu0 %v506
    %527 = vmatpush1.msra.mxu0 %v505
    %528 = vmatprep.subr.mxu0 %v503
    %529 = vmatpush1.msra.mxu0 %v502
    %530 = vmatprep.subr.mxu0 %v500
    %531 = vmatpush1.msra.mxu0 %v499
    %532 = vmatprep.subr.mxu0 %v497
    %533 = vmatpush1.msra.mxu0 %v496
    %534 = vmatprep.subr.mxu0 %v494
    %535 = vmatpush1.msra.mxu0 %v493
    %536 = vmatprep.subr.mxu0 %v491
    %537 = vmatpush1.msra.mxu0 %v490
    %538 = vmatprep.subr.mxu0 %v488
    %539 = vmatpush1.msra.mxu0 %v487
    %540 = vmatprep.subr.mxu0 %v485
    %541 = vmatpush1.msra.mxu0 %v484
    %542 = vmatprep.subr.mxu0 %v482
    %543 = vmatpush1.msra.mxu0 %v481
    %544 = vmatprep.subr.mxu0 %v479
    %545 = vmatpush1.msra.mxu0 %v478
    %546 = vmatprep.subr.mxu0 %v476
    %547 = vmatpush1.msra.mxu0 %v475
    %548 = vmatprep.subr.mxu0 %v473
    %549 = vmatpush1.msra.mxu0 %v472
    %550 = vmatprep.subr.mxu0 %v470
    %551 = vmatpush1.msra.mxu0 %v469
    %552 = vmatprep.subr.mxu0 %v467
    %553 = vmatpush1.msra.mxu0 %v466
    %554 = vmatprep.subr.mxu0 %v464
    %555 = vmatpush1.msra.mxu0 %v463
    %556 = vmatprep.subr.mxu0 %v461
    %557 = vmatpush1.msra.mxu0 %v460
    %558 = vmatprep.subr.mxu0 0.0
    %559 = vmatpush2.msra.mxu0 0.0
    %560 = vmatprep.subr.mxu0 0.0
    %561 = vmatpush2.msra.mxu0 0.0
    %562 = vmatprep.subr.mxu0 0.0
    %563 = vmatpush2.msra.mxu0 0.0
    %564 = vmatprep.subr.mxu0 0.0
    %565 = vmatpush2.msra.mxu0 0.0
    %566 = vmatprep.subr.mxu0 0.0
    %567 = vmatpush2.msra.mxu0 0.0
    %568 = vmatprep.subr.mxu0 0.0
    %569 = vmatpush2.msra.mxu0 0.0
    %570 = vmatprep.subr.mxu0 0.0
    %571 = vmatpush2.msra.mxu0 0.0
    %572 = vmatprep.subr.mxu0 0.0
    %573 = vmatpush2.msra.mxu0 0.0
    %574 = vmatprep.subr.mxu0 0.0
    %575 = vmatpush2.msra.mxu0 0.0
    %576 = vmatprep.subr.mxu0 0.0
    %577 = vmatpush2.msra.mxu0 0.0
    %578 = vmatprep.subr.mxu0 0.0
    %579 = vmatpush2.msra.mxu0 0.0
    %580 = vmatprep.subr.mxu0 0.0
    %581 = vmatpush2.msra.mxu0 0.0
    %582 = vmatprep.subr.mxu0 0.0
    %583 = vmatpush2.msra.mxu0 0.0
    %584 = vmatprep.subr.mxu0 0.0
    %585 = vmatpush2.msra.mxu0 0.0
    %586 = vmatprep.subr.mxu0 0.0
    %587 = vmatpush2.msra.mxu0 0.0
    %588 = vmatprep.subr.mxu0 0.0
    %589 = vmatpush2.msra.mxu0 0.0
    %590 = vmatprep.mubr.f32.mxu0 0.0
    %591 = vmatmul.mubr.f32.gmra.mxu0 %v458
    %v592 = vpop.f32.mrf.mxu0
    %v593 = vadd.f32 %v514, %v592
    %v594 = vpop.f32.mrf.mxu0
    %v595 = vadd.f32 %v518, %v594
    %596 = vdwg.mxu0
    %597 = vmatprep.subr.mxu0 0.0
    %598 = vmatpush1.msra.mxu0 %v507
    %599 = vmatprep.subr.mxu0 0.0
    %600 = vmatpush1.msra.mxu0 %v504
    %601 = vmatprep.subr.mxu0 0.0
    %602 = vmatpush1.msra.mxu0 %v501
    %603 = vmatprep.subr.mxu0 0.0
    %604 = vmatpush1.msra.mxu0 %v498
    %605 = vmatprep.subr.mxu0 0.0
    %606 = vmatpush1.msra.mxu0 %v495
    %607 = vmatprep.subr.mxu0 0.0
    %608 = vmatpush1.msra.mxu0 %v492
    %609 = vmatprep.subr.mxu0 0.0
    %610 = vmatpush1.msra.mxu0 %v489
    %611 = vmatprep.subr.mxu0 0.0
    %612 = vmatpush1.msra.mxu0 %v486
    %613 = vmatprep.subr.mxu0 0.0
    %614 = vmatpush1.msra.mxu0 %v483
    %615 = vmatprep.subr.mxu0 0.0
    %616 = vmatpush1.msra.mxu0 %v480
    %617 = vmatprep.subr.mxu0 0.0
    %618 = vmatpush1.msra.mxu0 %v477
    %619 = vmatprep.subr.mxu0 0.0
    %620 = vmatpush1.msra.mxu0 %v474
    %621 = vmatprep.subr.mxu0 0.0
    %622 = vmatpush1.msra.mxu0 %v471
    %623 = vmatprep.subr.mxu0 0.0
    %624 = vmatpush1.msra.mxu0 %v468
    %625 = vmatprep.subr.mxu0 0.0
    %626 = vmatpush1.msra.mxu0 %v465
    %627 = vmatprep.subr.mxu0 0.0
    %628 = vmatpush1.msra.mxu0 %v462
    %629 = vmatprep.subr.mxu0 0.0
    %630 = vmatpush2.msra.mxu0 0.0
    %631 = vmatprep.subr.mxu0 0.0
    %632 = vmatpush2.msra.mxu0 0.0
    %633 = vmatprep.subr.mxu0 0.0
    %634 = vmatpush2.msra.mxu0 0.0
    %635 = vmatprep.subr.mxu0 0.0
    %636 = vmatpush2.msra.mxu0 0.0
    %637 = vmatprep.subr.mxu0 0.0
    %638 = vmatpush2.msra.mxu0 0.0
    %639 = vmatprep.subr.mxu0 0.0
    %640 = vmatpush2.msra.mxu0 0.0
    %641 = vmatprep.subr.mxu0 0.0
    %642 = vmatpush2.msra.mxu0 0.0
    %643 = vmatprep.subr.mxu0 0.0
    %644 = vmatpush2.msra.mxu0 0.0
    %645 = vmatprep.subr.mxu0 0.0
    %646 = vmatpush2.msra.mxu0 0.0
    %647 = vmatprep.subr.mxu0 0.0
    %648 = vmatpush2.msra.mxu0 0.0
    %649 = vmatprep.subr.mxu0 0.0
    %650 = vmatpush2.msra.mxu0 0.0
    %651 = vmatprep.subr.mxu0 0.0
    %652 = vmatpush2.msra.mxu0 0.0
    %653 = vmatprep.subr.mxu0 0.0
    %654 = vmatpush2.msra.mxu0 0.0
    %655 = vmatprep.subr.mxu0 0.0
    %656 = vmatpush2.msra.mxu0 0.0
    %657 = vmatprep.subr.mxu0 0.0
    %658 = vmatpush2.msra.mxu0 0.0
    %659 = vmatprep.subr.mxu0 0.0
    %660 = vmatpush2.msra.mxu0 0.0
    %661 = vmatprep.mubr.f32.mxu0 0.0
    %662 = vmatmul.mubr.f32.gmra.mxu0 %v458
    %v663 = vpop.f32.mrf.mxu0
    %v664 = vadd.f32 %v522, %v663
    %v665 = vpop.f32.mrf.mxu0
    %666 = vdwg.mxu0
    %v667 = vxor.u32 %v593, 2147483648
    %v668 = vmul.f32 %v667, 1.442695
    %v669 = vpow.pop %v668
    %v670 = vadd.f32 %v669, 1.0
    %v671 = vrcp.pop %v670
    %v672 = vmul.f32 1.0, %v671
    %v673 = vtanh.pop %v595
    %v674 = vxor.u32 %v664, 2147483648
    %v675 = vmul.f32 %v674, 1.442695
    %v676 = vpow.pop %v675
    %v677 = vadd.f32 %v676, 1.0
    %v678 = vrcp.pop %v677
    %v679 = vmul.f32 1.0, %v678
    %v680 = vmul.f32 %v672, %v673
    %v681 = vtanh.pop %v680
    %v682 = vmul.f32 %v679, %v681
    %s683 = scalar_lea.vmem [#allocation3], 768
    %v684 = vld [vmem:[%s683] sm:$0xff]
    %v685 = vld [vmem:[%s683 + $0x8] sm:$0xff]
    %v686 = vld [vmem:[%s683 + $0x10] sm:$0xff]
    %v687 = vld [vmem:[%s683 + $0x18] sm:$0xff]
    %v688 = vld [vmem:[%s683 + $0x20] sm:$0xff]
    %v689 = vld [vmem:[%s683 + $0x28] sm:$0xff]
    %v690 = vld [vmem:[%s683 + $0x30] sm:$0xff]
    %v691 = vld [vmem:[%s683 + $0x38] sm:$0xff]
    %v692 = vld [vmem:[%s683 + $0x40] sm:$0xff]
    %v693 = vld [vmem:[%s683 + $0x48] sm:$0xff]
    %v694 = vld [vmem:[%s683 + $0x50] sm:$0xff]
    %v695 = vld [vmem:[%s683 + $0x58] sm:$0xff]
    %v696 = vld [vmem:[%s683 + $0x60] sm:$0xff]
    %v697 = vld [vmem:[%s683 + $0x68] sm:$0xff]
    %v698 = vld [vmem:[%s683 + $0x70] sm:$0xff]
    %v699 = vld [vmem:[%s683 + $0x78] sm:$0xff]
    %v700 = vld [vmem:[%s683 + $0x80] sm:$0xff]
    %v701 = vld [vmem:[%s683 + $0x88] sm:$0xff]
    %v702 = vld [vmem:[%s683 + $0x90] sm:$0xff]
    %v703 = vld [vmem:[%s683 + $0x98] sm:$0xff]
    %v704 = vld [vmem:[%s683 + $0xa0] sm:$0xff]
    %v705 = vld [vmem:[%s683 + $0xa8] sm:$0xff]
    %v706 = vld [vmem:[%s683 + $0xb0] sm:$0xff]
    %v707 = vld [vmem:[%s683 + $0xb8] sm:$0xff]
    %v708 = vld [vmem:[%s683 + $0xc0] sm:$0xff]
    %v709 = vld [vmem:[%s683 + $0xc8] sm:$0xff]
    %v710 = vld [vmem:[%s683 + $0xd0] sm:$0xff]
    %v711 = vld [vmem:[%s683 + $0xd8] sm:$0xff]
    %v712 = vld [vmem:[%s683 + $0xe0] sm:$0xff]
    %v713 = vld [vmem:[%s683 + $0xe8] sm:$0xff]
    %v714 = vld [vmem:[%s683 + $0xf0] sm:$0xff]
    %v715 = vld [vmem:[%s683 + $0xf8] sm:$0xff]
    %v716 = vld [vmem:[%s683 + $0x100] sm:$0xff]
    %v717 = vld [vmem:[%s683 + $0x108] sm:$0xff]
    %v718 = vld [vmem:[%s683 + $0x110] sm:$0xff]
    %v719 = vld [vmem:[%s683 + $0x118] sm:$0xff]
    %v720 = vld [vmem:[%s683 + $0x120] sm:$0xff]
    %v721 = vld [vmem:[%s683 + $0x128] sm:$0xff]
    %v722 = vld [vmem:[%s683 + $0x130] sm:$0xff]
    %v723 = vld [vmem:[%s683 + $0x138] sm:$0xff]
    %v724 = vld [vmem:[%s683 + $0x140] sm:$0xff]
    %v725 = vld [vmem:[%s683 + $0x148] sm:$0xff]
    %v726 = vld [vmem:[%s683 + $0x150] sm:$0xff]
    %v727 = vld [vmem:[%s683 + $0x158] sm:$0xff]
    %v728 = vld [vmem:[%s683 + $0x160] sm:$0xff]
    %v729 = vld [vmem:[%s683 + $0x168] sm:$0xff]
    %v730 = vld [vmem:[%s683 + $0x170] sm:$0xff]
    %v731 = vld [vmem:[%s683 + $0x178] sm:$0xff]
    %s732 = scalar_lea.vmem %s4, 6
    %v733 = vld [vmem:[%s732] sm:$0x7]
    %v735 = vlaneseq
    %v736 = vshrl.u32 %v735, 7
    %v737 = vsub.s32 0, %v736
    %v738 = vrot.slane %v733, %v737
    %v739 = vlaneseq
    %v740 = vshrl.u32 %v739, 7
    %v741 = vsub.s32 1, %v740
    %v742 = vrot.slane %v733, %v741
    %v743 = vlaneseq
    %v744 = vshrl.u32 %v743, 7
    %v745 = vsub.s32 2, %v744
    %v746 = vrot.slane %v733, %v745
    %750 = vmatprep.subr.mxu0 %v730
    %751 = vmatpush1.msra.mxu0 %v729
    %752 = vmatprep.subr.mxu0 %v727
    %753 = vmatpush1.msra.mxu0 %v726
    %754 = vmatprep.subr.mxu0 %v724
    %755 = vmatpush1.msra.mxu0 %v723
    %756 = vmatprep.subr.mxu0 %v721
    %757 = vmatpush1.msra.mxu0 %v720
    %758 = vmatprep.subr.mxu0 %v718
    %759 = vmatpush1.msra.mxu0 %v717
    %760 = vmatprep.subr.mxu0 %v715
    %761 = vmatpush1.msra.mxu0 %v714
    %762 = vmatprep.subr.mxu0 %v712
    %763 = vmatpush1.msra.mxu0 %v711
    %764 = vmatprep.subr.mxu0 %v709
    %765 = vmatpush1.msra.mxu0 %v708
    %766 = vmatprep.subr.mxu0 %v706
    %767 = vmatpush1.msra.mxu0 %v705
    %768 = vmatprep.subr.mxu0 %v703
    %769 = vmatpush1.msra.mxu0 %v702
    %770 = vmatprep.subr.mxu0 %v700
    %771 = vmatpush1.msra.mxu0 %v699
    %772 = vmatprep.subr.mxu0 %v697
    %773 = vmatpush1.msra.mxu0 %v696
    %774 = vmatprep.subr.mxu0 %v694
    %775 = vmatpush1.msra.mxu0 %v693
    %776 = vmatprep.subr.mxu0 %v691
    %777 = vmatpush1.msra.mxu0 %v690
    %778 = vmatprep.subr.mxu0 %v688
    %779 = vmatpush1.msra.mxu0 %v687
    %780 = vmatprep.subr.mxu0 %v685
    %781 = vmatpush1.msra.mxu0 %v684
    %782 = vmatprep.subr.mxu0 0.0
    %783 = vmatpush2.msra.mxu0 0.0
    %784 = vmatprep.subr.mxu0 0.0
    %785 = vmatpush2.msra.mxu0 0.0
    %786 = vmatprep.subr.mxu0 0.0
    %787 = vmatpush2.msra.mxu0 0.0
    %788 = vmatprep.subr.mxu0 0.0
    %789 = vmatpush2.msra.mxu0 0.0
    %790 = vmatprep.subr.mxu0 0.0
    %791 = vmatpush2.msra.mxu0 0.0
    %792 = vmatprep.subr.mxu0 0.0
    %793 = vmatpush2.msra.mxu0 0.0
    %794 = vmatprep.subr.mxu0 0.0
    %795 = vmatpush2.msra.mxu0 0.0
    %796 = vmatprep.subr.mxu0 0.0
    %797 = vmatpush2.msra.mxu0 0.0
    %798 = vmatprep.subr.mxu0 0.0
    %799 = vmatpush2.msra.mxu0 0.0
    %800 = vmatprep.subr.mxu0 0.0
    %801 = vmatpush2.msra.mxu0 0.0
    %802 = vmatprep.subr.mxu0 0.0
    %803 = vmatpush2.msra.mxu0 0.0
    %804 = vmatprep.subr.mxu0 0.0
    %805 = vmatpush2.msra.mxu0 0.0
    %806 = vmatprep.subr.mxu0 0.0
    %807 = vmatpush2.msra.mxu0 0.0
    %808 = vmatprep.subr.mxu0 0.0
    %809 = vmatpush2.msra.mxu0 0.0
    %810 = vmatprep.subr.mxu0 0.0
    %811 = vmatpush2.msra.mxu0 0.0
    %812 = vmatprep.subr.mxu0 0.0
    %813 = vmatpush2.msra.mxu0 0.0
    %814 = vmatprep.mubr.f32.mxu0 0.0
    %815 = vmatmul.mubr.f32.gmra.mxu0 %v682
    %v816 = vpop.f32.mrf.mxu0
    %v817 = vadd.f32 %v738, %v816
    %v818 = vpop.f32.mrf.mxu0
    %v819 = vadd.f32 %v742, %v818
    %820 = vdwg.mxu0
    %821 = vmatprep.subr.mxu0 0.0
    %822 = vmatpush1.msra.mxu0 %v731
    %823 = vmatprep.subr.mxu0 0.0
    %824 = vmatpush1.msra.mxu0 %v728
    %825 = vmatprep.subr.mxu0 0.0
    %826 = vmatpush1.msra.mxu0 %v725
    %827 = vmatprep.subr.mxu0 0.0
    %828 = vmatpush1.msra.mxu0 %v722
    %829 = vmatprep.subr.mxu0 0.0
    %830 = vmatpush1.msra.mxu0 %v719
    %831 = vmatprep.subr.mxu0 0.0
    %832 = vmatpush1.msra.mxu0 %v716
    %833 = vmatprep.subr.mxu0 0.0
    %834 = vmatpush1.msra.mxu0 %v713
    %835 = vmatprep.subr.mxu0 0.0
    %836 = vmatpush1.msra.mxu0 %v710
    %837 = vmatprep.subr.mxu0 0.0
    %838 = vmatpush1.msra.mxu0 %v707
    %839 = vmatprep.subr.mxu0 0.0
    %840 = vmatpush1.msra.mxu0 %v704
    %841 = vmatprep.subr.mxu0 0.0
    %842 = vmatpush1.msra.mxu0 %v701
    %843 = vmatprep.subr.mxu0 0.0
    %844 = vmatpush1.msra.mxu0 %v698
    %845 = vmatprep.subr.mxu0 0.0
    %846 = vmatpush1.msra.mxu0 %v695
    %847 = vmatprep.subr.mxu0 0.0
    %848 = vmatpush1.msra.mxu0 %v692
    %849 = vmatprep.subr.mxu0 0.0
    %850 = vmatpush1.msra.mxu0 %v689
    %851 = vmatprep.subr.mxu0 0.0
    %852 = vmatpush1.msra.mxu0 %v686
    %853 = vmatprep.subr.mxu0 0.0
    %854 = vmatpush2.msra.mxu0 0.0
    %855 = vmatprep.subr.mxu0 0.0
    %856 = vmatpush2.msra.mxu0 0.0
    %857 = vmatprep.subr.mxu0 0.0
    %858 = vmatpush2.msra.mxu0 0.0
    %859 = vmatprep.subr.mxu0 0.0
    %860 = vmatpush2.msra.mxu0 0.0
    %861 = vmatprep.subr.mxu0 0.0
    %862 = vmatpush2.msra.mxu0 0.0
    %863 = vmatprep.subr.mxu0 0.0
    %864 = vmatpush2.msra.mxu0 0.0
    %865 = vmatprep.subr.mxu0 0.0
    %866 = vmatpush2.msra.mxu0 0.0
    %867 = vmatprep.subr.mxu0 0.0
    %868 = vmatpush2.msra.mxu0 0.0
    %869 = vmatprep.subr.mxu0 0.0
    %870 = vmatpush2.msra.mxu0 0.0
    %871 = vmatprep.subr.mxu0 0.0
    %872 = vmatpush2.msra.mxu0 0.0
    %873 = vmatprep.subr.mxu0 0.0
    %874 = vmatpush2.msra.mxu0 0.0
    %875 = vmatprep.subr.mxu0 0.0
    %876 = vmatpush2.msra.mxu0 0.0
    %877 = vmatprep.subr.mxu0 0.0
    %878 = vmatpush2.msra.mxu0 0.0
    %879 = vmatprep.subr.mxu0 0.0
    %880 = vmatpush2.msra.mxu0 0.0
    %881 = vmatprep.subr.mxu0 0.0
    %882 = vmatpush2.msra.mxu0 0.0
    %883 = vmatprep.subr.mxu0 0.0
    %884 = vmatpush2.msra.mxu0 0.0
    %885 = vmatprep.mubr.f32.mxu0 0.0
    %886 = vmatmul.mubr.f32.gmra.mxu0 %v682
    %v887 = vpop.f32.mrf.mxu0
    %v888 = vadd.f32 %v746, %v887
    %v889 = vpop.f32.mrf.mxu0
    %890 = vdwg.mxu0
    %v891 = vxor.u32 %v817, 2147483648
    %v892 = vmul.f32 %v891, 1.442695
    %v893 = vpow.pop %v892
    %v894 = vadd.f32 %v893, 1.0
    %v895 = vrcp.pop %v894
    %v896 = vmul.f32 1.0, %v895
    %v897 = vtanh.pop %v819
    %v898 = vxor.u32 %v888, 2147483648
    %v899 = vmul.f32 %v898, 1.442695
    %v900 = vpow.pop %v899
    %v901 = vadd.f32 %v900, 1.0
    %v902 = vrcp.pop %v901
    %v903 = vmul.f32 1.0, %v902
    %v904 = vmul.f32 %v896, %v897
    %v905 = vtanh.pop %v904
    %v906 = vmul.f32 %v903, %v905
    %s907 = scalar_lea.vmem [#allocation3], 1152
    %v908 = vld [vmem:[%s907] sm:$0xff]
    %v909 = vld [vmem:[%s907 + $0x8] sm:$0xff]
    %v910 = vld [vmem:[%s907 + $0x10] sm:$0xff]
    %v911 = vld [vmem:[%s907 + $0x18] sm:$0xff]
    %v912 = vld [vmem:[%s907 + $0x20] sm:$0xff]
    %v913 = vld [vmem:[%s907 + $0x28] sm:$0xff]
    %v914 = vld [vmem:[%s907 + $0x30] sm:$0xff]
    %v915 = vld [vmem:[%s907 + $0x38] sm:$0xff]
    %v916 = vld [vmem:[%s907 + $0x40] sm:$0xff]
    %v917 = vld [vmem:[%s907 + $0x48] sm:$0xff]
    %v918 = vld [vmem:[%s907 + $0x50] sm:$0xff]
    %v919 = vld [vmem:[%s907 + $0x58] sm:$0xff]
    %v920 = vld [vmem:[%s907 + $0x60] sm:$0xff]
    %v921 = vld [vmem:[%s907 + $0x68] sm:$0xff]
    %v922 = vld [vmem:[%s907 + $0x70] sm:$0xff]
    %v923 = vld [vmem:[%s907 + $0x78] sm:$0xff]
    %v924 = vld [vmem:[%s907 + $0x80] sm:$0xff]
    %v925 = vld [vmem:[%s907 + $0x88] sm:$0xff]
    %v926 = vld [vmem:[%s907 + $0x90] sm:$0xff]
    %v927 = vld [vmem:[%s907 + $0x98] sm:$0xff]
    %v928 = vld [vmem:[%s907 + $0xa0] sm:$0xff]
    %v929 = vld [vmem:[%s907 + $0xa8] sm:$0xff]
    %v930 = vld [vmem:[%s907 + $0xb0] sm:$0xff]
    %v931 = vld [vmem:[%s907 + $0xb8] sm:$0xff]
    %v932 = vld [vmem:[%s907 + $0xc0] sm:$0xff]
    %v933 = vld [vmem:[%s907 + $0xc8] sm:$0xff]
    %v934 = vld [vmem:[%s907 + $0xd0] sm:$0xff]
    %v935 = vld [vmem:[%s907 + $0xd8] sm:$0xff]
    %v936 = vld [vmem:[%s907 + $0xe0] sm:$0xff]
    %v937 = vld [vmem:[%s907 + $0xe8] sm:$0xff]
    %v938 = vld [vmem:[%s907 + $0xf0] sm:$0xff]
    %v939 = vld [vmem:[%s907 + $0xf8] sm:$0xff]
    %v940 = vld [vmem:[%s907 + $0x100] sm:$0xff]
    %v941 = vld [vmem:[%s907 + $0x108] sm:$0xff]
    %v942 = vld [vmem:[%s907 + $0x110] sm:$0xff]
    %v943 = vld [vmem:[%s907 + $0x118] sm:$0xff]
    %v944 = vld [vmem:[%s907 + $0x120] sm:$0xff]
    %v945 = vld [vmem:[%s907 + $0x128] sm:$0xff]
    %v946 = vld [vmem:[%s907 + $0x130] sm:$0xff]
    %v947 = vld [vmem:[%s907 + $0x138] sm:$0xff]
    %v948 = vld [vmem:[%s907 + $0x140] sm:$0xff]
    %v949 = vld [vmem:[%s907 + $0x148] sm:$0xff]
    %v950 = vld [vmem:[%s907 + $0x150] sm:$0xff]
    %v951 = vld [vmem:[%s907 + $0x158] sm:$0xff]
    %v952 = vld [vmem:[%s907 + $0x160] sm:$0xff]
    %v953 = vld [vmem:[%s907 + $0x168] sm:$0xff]
    %v954 = vld [vmem:[%s907 + $0x170] sm:$0xff]
    %v955 = vld [vmem:[%s907 + $0x178] sm:$0xff]
    %s956 = scalar_lea.vmem %s4, 9
    %v957 = vld [vmem:[%s956] sm:$0x7]
    %v959 = vlaneseq
    %v960 = vshrl.u32 %v959, 7
    %v961 = vsub.s32 0, %v960
    %v962 = vrot.slane %v957, %v961
    %v963 = vlaneseq
    %v964 = vshrl.u32 %v963, 7
    %v965 = vsub.s32 1, %v964
    %v966 = vrot.slane %v957, %v965
    %v967 = vlaneseq
    %v968 = vshrl.u32 %v967, 7
    %v969 = vsub.s32 2, %v968
    %v970 = vrot.slane %v957, %v969
    %974 = vmatprep.subr.mxu0 %v954
    %975 = vmatpush1.msra.mxu0 %v953
    %976 = vmatprep.subr.mxu0 %v951
    %977 = vmatpush1.msra.mxu0 %v950
    %978 = vmatprep.subr.mxu0 %v948
    %979 = vmatpush1.msra.mxu0 %v947
    %980 = vmatprep.subr.mxu0 %v945
    %981 = vmatpush1.msra.mxu0 %v944
    %982 = vmatprep.subr.mxu0 %v942
    %983 = vmatpush1.msra.mxu0 %v941
    %984 = vmatprep.subr.mxu0 %v939
    %985 = vmatpush1.msra.mxu0 %v938
    %986 = vmatprep.subr.mxu0 %v936
    %987 = vmatpush1.msra.mxu0 %v935
    %988 = vmatprep.subr.mxu0 %v933
    %989 = vmatpush1.msra.mxu0 %v932
    %990 = vmatprep.subr.mxu0 %v930
    %991 = vmatpush1.msra.mxu0 %v929
    %992 = vmatprep.subr.mxu0 %v927
    %993 = vmatpush1.msra.mxu0 %v926
    %994 = vmatprep.subr.mxu0 %v924
    %995 = vmatpush1.msra.mxu0 %v923
    %996 = vmatprep.subr.mxu0 %v921
    %997 = vmatpush1.msra.mxu0 %v920
    %998 = vmatprep.subr.mxu0 %v918
    %999 = vmatpush1.msra.mxu0 %v917
    %1000 = vmatprep.subr.mxu0 %v915
    %1001 = vmatpush1.msra.mxu0 %v914
    %1002 = vmatprep.subr.mxu0 %v912
    %1003 = vmatpush1.msra.mxu0 %v911
    %1004 = vmatprep.subr.mxu0 %v909
    %1005 = vmatpush1.msra.mxu0 %v908
    %1006 = vmatprep.subr.mxu0 0.0
    %1007 = vmatpush2.msra.mxu0 0.0
    %1008 = vmatprep.subr.mxu0 0.0
    %1009 = vmatpush2.msra.mxu0 0.0
    %1010 = vmatprep.subr.mxu0 0.0
    %1011 = vmatpush2.msra.mxu0 0.0
    %1012 = vmatprep.subr.mxu0 0.0
    %1013 = vmatpush2.msra.mxu0 0.0
    %1014 = vmatprep.subr.mxu0 0.0
    %1015 = vmatpush2.msra.mxu0 0.0
    %1016 = vmatprep.subr.mxu0 0.0
    %1017 = vmatpush2.msra.mxu0 0.0
    %1018 = vmatprep.subr.mxu0 0.0
    %1019 = vmatpush2.msra.mxu0 0.0
    %1020 = vmatprep.subr.mxu0 0.0
    %1021 = vmatpush2.msra.mxu0 0.0
    %1022 = vmatprep.subr.mxu0 0.0
    %1023 = vmatpush2.msra.mxu0 0.0
    %1024 = vmatprep.subr.mxu0 0.0
    %1025 = vmatpush2.msra.mxu0 0.0
    %1026 = vmatprep.subr.mxu0 0.0
    %1027 = vmatpush2.msra.mxu0 0.0
    %1028 = vmatprep.subr.mxu0 0.0
    %1029 = vmatpush2.msra.mxu0 0.0
    %1030 = vmatprep.subr.mxu0 0.0
    %1031 = vmatpush2.msra.mxu0 0.0
    %1032 = vmatprep.subr.mxu0 0.0
    %1033 = vmatpush2.msra.mxu0 0.0
    %1034 = vmatprep.subr.mxu0 0.0
    %1035 = vmatpush2.msra.mxu0 0.0
    %1036 = vmatprep.subr.mxu0 0.0
    %1037 = vmatpush2.msra.mxu0 0.0
    %1038 = vmatprep.mubr.f32.mxu0 0.0
    %1039 = vmatmul.mubr.f32.gmra.mxu0 %v906
    %v1040 = vpop.f32.mrf.mxu0
    %v1041 = vadd.f32 %v962, %v1040
    %v1042 = vpop.f32.mrf.mxu0
    %v1043 = vadd.f32 %v966, %v1042
    %1044 = vdwg.mxu0
    %1045 = vmatprep.subr.mxu0 0.0
    %1046 = vmatpush1.msra.mxu0 %v955
    %1047 = vmatprep.subr.mxu0 0.0
    %1048 = vmatpush1.msra.mxu0 %v952
    %1049 = vmatprep.subr.mxu0 0.0
    %1050 = vmatpush1.msra.mxu0 %v949
    %1051 = vmatprep.subr.mxu0 0.0
    %1052 = vmatpush1.msra.mxu0 %v946
    %1053 = vmatprep.subr.mxu0 0.0
    %1054 = vmatpush1.msra.mxu0 %v943
    %1055 = vmatprep.subr.mxu0 0.0
    %1056 = vmatpush1.msra.mxu0 %v940
    %1057 = vmatprep.subr.mxu0 0.0
    %1058 = vmatpush1.msra.mxu0 %v937
    %1059 = vmatprep.subr.mxu0 0.0
    %1060 = vmatpush1.msra.mxu0 %v934
    %1061 = vmatprep.subr.mxu0 0.0
    %1062 = vmatpush1.msra.mxu0 %v931
    %1063 = vmatprep.subr.mxu0 0.0
    %1064 = vmatpush1.msra.mxu0 %v928
    %1065 = vmatprep.subr.mxu0 0.0
    %1066 = vmatpush1.msra.mxu0 %v925
    %1067 = vmatprep.subr.mxu0 0.0
    %1068 = vmatpush1.msra.mxu0 %v922
    %1069 = vmatprep.subr.mxu0 0.0
    %1070 = vmatpush1.msra.mxu0 %v919
    %1071 = vmatprep.subr.mxu0 0.0
    %1072 = vmatpush1.msra.mxu0 %v916
    %1073 = vmatprep.subr.mxu0 0.0
    %1074 = vmatpush1.msra.mxu0 %v913
    %1075 = vmatprep.subr.mxu0 0.0
    %1076 = vmatpush1.msra.mxu0 %v910
    %1077 = vmatprep.subr.mxu0 0.0
    %1078 = vmatpush2.msra.mxu0 0.0
    %1079 = vmatprep.subr.mxu0 0.0
    %1080 = vmatpush2.msra.mxu0 0.0
    %1081 = vmatprep.subr.mxu0 0.0
    %1082 = vmatpush2.msra.mxu0 0.0
    %1083 = vmatprep.subr.mxu0 0.0
    %1084 = vmatpush2.msra.mxu0 0.0
    %1085 = vmatprep.subr.mxu0 0.0
    %1086 = vmatpush2.msra.mxu0 0.0
    %1087 = vmatprep.subr.mxu0 0.0
    %1088 = vmatpush2.msra.mxu0 0.0
    %1089 = vmatprep.subr.mxu0 0.0
    %1090 = vmatpush2.msra.mxu0 0.0
    %1091 = vmatprep.subr.mxu0 0.0
    %1092 = vmatpush2.msra.mxu0 0.0
    %1093 = vmatprep.subr.mxu0 0.0
    %1094 = vmatpush2.msra.mxu0 0.0
    %1095 = vmatprep.subr.mxu0 0.0
    %1096 = vmatpush2.msra.mxu0 0.0
    %1097 = vmatprep.subr.mxu0 0.0
    %1098 = vmatpush2.msra.mxu0 0.0
    %1099 = vmatprep.subr.mxu0 0.0
    %1100 = vmatpush2.msra.mxu0 0.0
    %1101 = vmatprep.subr.mxu0 0.0
    %1102 = vmatpush2.msra.mxu0 0.0
    %1103 = vmatprep.subr.mxu0 0.0
    %1104 = vmatpush2.msra.mxu0 0.0
    %1105 = vmatprep.subr.mxu0 0.0
    %1106 = vmatpush2.msra.mxu0 0.0
    %1107 = vmatprep.subr.mxu0 0.0
    %1108 = vmatpush2.msra.mxu0 0.0
    %1109 = vmatprep.mubr.f32.mxu0 0.0
    %1110 = vmatmul.mubr.f32.gmra.mxu0 %v906
    %v1111 = vpop.f32.mrf.mxu0
    %v1112 = vadd.f32 %v970, %v1111
    %v1113 = vpop.f32.mrf.mxu0
    %1114 = vdwg.mxu0
    %v1115 = vxor.u32 %v1041, 2147483648
    %v1116 = vmul.f32 %v1115, 1.442695
    %v1117 = vpow.pop %v1116
    %v1118 = vadd.f32 %v1117, 1.0
    %v1119 = vrcp.pop %v1118
    %v1120 = vmul.f32 1.0, %v1119
    %v1121 = vtanh.pop %v1043
    %v1122 = vxor.u32 %v1112, 2147483648
    %v1123 = vmul.f32 %v1122, 1.442695
    %v1124 = vpow.pop %v1123
    %v1125 = vadd.f32 %v1124, 1.0
    %v1126 = vrcp.pop %v1125
    %v1127 = vmul.f32 1.0, %v1126
    %v1128 = vmul.f32 %v1120, %v1121
    %v1129 = vtanh.pop %v1128
    %v1130 = vmul.f32 %v1127, %v1129
    %s1131 = scalar_lea.vmem [#allocation3], 1536
    %v1132 = vld [vmem:[%s1131] sm:$0xff]
    %v1133 = vld [vmem:[%s1131 + $0x8] sm:$0xff]
    %v1134 = vld [vmem:[%s1131 + $0x10] sm:$0xff]
    %v1135 = vld [vmem:[%s1131 + $0x18] sm:$0xff]
    %v1136 = vld [vmem:[%s1131 + $0x20] sm:$0xff]
    %v1137 = vld [vmem:[%s1131 + $0x28] sm:$0xff]
    %v1138 = vld [vmem:[%s1131 + $0x30] sm:$0xff]
    %v1139 = vld [vmem:[%s1131 + $0x38] sm:$0xff]
    %v1140 = vld [vmem:[%s1131 + $0x40] sm:$0xff]
    %v1141 = vld [vmem:[%s1131 + $0x48] sm:$0xff]
    %v1142 = vld [vmem:[%s1131 + $0x50] sm:$0xff]
    %v1143 = vld [vmem:[%s1131 + $0x58] sm:$0xff]
    %v1144 = vld [vmem:[%s1131 + $0x60] sm:$0xff]
    %v1145 = vld [vmem:[%s1131 + $0x68] sm:$0xff]
    %v1146 = vld [vmem:[%s1131 + $0x70] sm:$0xff]
    %v1147 = vld [vmem:[%s1131 + $0x78] sm:$0xff]
    %v1148 = vld [vmem:[%s1131 + $0x80] sm:$0xff]
    %v1149 = vld [vmem:[%s1131 + $0x88] sm:$0xff]
    %v1150 = vld [vmem:[%s1131 + $0x90] sm:$0xff]
    %v1151 = vld [vmem:[%s1131 + $0x98] sm:$0xff]
    %v1152 = vld [vmem:[%s1131 + $0xa0] sm:$0xff]
    %v1153 = vld [vmem:[%s1131 + $0xa8] sm:$0xff]
    %v1154 = vld [vmem:[%s1131 + $0xb0] sm:$0xff]
    %v1155 = vld [vmem:[%s1131 + $0xb8] sm:$0xff]
    %v1156 = vld [vmem:[%s1131 + $0xc0] sm:$0xff]
    %v1157 = vld [vmem:[%s1131 + $0xc8] sm:$0xff]
    %v1158 = vld [vmem:[%s1131 + $0xd0] sm:$0xff]
    %v1159 = vld [vmem:[%s1131 + $0xd8] sm:$0xff]
    %v1160 = vld [vmem:[%s1131 + $0xe0] sm:$0xff]
    %v1161 = vld [vmem:[%s1131 + $0xe8] sm:$0xff]
    %v1162 = vld [vmem:[%s1131 + $0xf0] sm:$0xff]
    %v1163 = vld [vmem:[%s1131 + $0xf8] sm:$0xff]
    %v1164 = vld [vmem:[%s1131 + $0x100] sm:$0xff]
    %v1165 = vld [vmem:[%s1131 + $0x108] sm:$0xff]
    %v1166 = vld [vmem:[%s1131 + $0x110] sm:$0xff]
    %v1167 = vld [vmem:[%s1131 + $0x118] sm:$0xff]
    %v1168 = vld [vmem:[%s1131 + $0x120] sm:$0xff]
    %v1169 = vld [vmem:[%s1131 + $0x128] sm:$0xff]
    %v1170 = vld [vmem:[%s1131 + $0x130] sm:$0xff]
    %v1171 = vld [vmem:[%s1131 + $0x138] sm:$0xff]
    %v1172 = vld [vmem:[%s1131 + $0x140] sm:$0xff]
    %v1173 = vld [vmem:[%s1131 + $0x148] sm:$0xff]
    %v1174 = vld [vmem:[%s1131 + $0x150] sm:$0xff]
    %v1175 = vld [vmem:[%s1131 + $0x158] sm:$0xff]
    %v1176 = vld [vmem:[%s1131 + $0x160] sm:$0xff]
    %v1177 = vld [vmem:[%s1131 + $0x168] sm:$0xff]
    %v1178 = vld [vmem:[%s1131 + $0x170] sm:$0xff]
    %v1179 = vld [vmem:[%s1131 + $0x178] sm:$0xff]
    %s1180 = scalar_lea.vmem %s4, 12
    %v1181 = vld [vmem:[%s1180] sm:$0x7]
    %v1183 = vlaneseq
    %v1184 = vshrl.u32 %v1183, 7
    %v1185 = vsub.s32 0, %v1184
    %v1186 = vrot.slane %v1181, %v1185
    %v1187 = vlaneseq
    %v1188 = vshrl.u32 %v1187, 7
    %v1189 = vsub.s32 1, %v1188
    %v1190 = vrot.slane %v1181, %v1189
    %v1191 = vlaneseq
    %v1192 = vshrl.u32 %v1191, 7
    %v1193 = vsub.s32 2, %v1192
    %v1194 = vrot.slane %v1181, %v1193
    %1198 = vmatprep.subr.mxu0 %v1178
    %1199 = vmatpush1.msra.mxu0 %v1177
    %1200 = vmatprep.subr.mxu0 %v1175
    %1201 = vmatpush1.msra.mxu0 %v1174
    %1202 = vmatprep.subr.mxu0 %v1172
    %1203 = vmatpush1.msra.mxu0 %v1171
    %1204 = vmatprep.subr.mxu0 %v1169
    %1205 = vmatpush1.msra.mxu0 %v1168
    %1206 = vmatprep.subr.mxu0 %v1166
    %1207 = vmatpush1.msra.mxu0 %v1165
    %1208 = vmatprep.subr.mxu0 %v1163
    %1209 = vmatpush1.msra.mxu0 %v1162
    %1210 = vmatprep.subr.mxu0 %v1160
    %1211 = vmatpush1.msra.mxu0 %v1159
    %1212 = vmatprep.subr.mxu0 %v1157
    %1213 = vmatpush1.msra.mxu0 %v1156
    %1214 = vmatprep.subr.mxu0 %v1154
    %1215 = vmatpush1.msra.mxu0 %v1153
    %1216 = vmatprep.subr.mxu0 %v1151
    %1217 = vmatpush1.msra.mxu0 %v1150
    %1218 = vmatprep.subr.mxu0 %v1148
    %1219 = vmatpush1.msra.mxu0 %v1147
    %1220 = vmatprep.subr.mxu0 %v1145
    %1221 = vmatpush1.msra.mxu0 %v1144
    %1222 = vmatprep.subr.mxu0 %v1142
    %1223 = vmatpush1.msra.mxu0 %v1141
    %1224 = vmatprep.subr.mxu0 %v1139
    %1225 = vmatpush1.msra.mxu0 %v1138
    %1226 = vmatprep.subr.mxu0 %v1136
    %1227 = vmatpush1.msra.mxu0 %v1135
    %1228 = vmatprep.subr.mxu0 %v1133
    %1229 = vmatpush1.msra.mxu0 %v1132
    %1230 = vmatprep.subr.mxu0 0.0
    %1231 = vmatpush2.msra.mxu0 0.0
    %1232 = vmatprep.subr.mxu0 0.0
    %1233 = vmatpush2.msra.mxu0 0.0
    %1234 = vmatprep.subr.mxu0 0.0
    %1235 = vmatpush2.msra.mxu0 0.0
    %1236 = vmatprep.subr.mxu0 0.0
    %1237 = vmatpush2.msra.mxu0 0.0
    %1238 = vmatprep.subr.mxu0 0.0
    %1239 = vmatpush2.msra.mxu0 0.0
    %1240 = vmatprep.subr.mxu0 0.0
    %1241 = vmatpush2.msra.mxu0 0.0
    %1242 = vmatprep.subr.mxu0 0.0
    %1243 = vmatpush2.msra.mxu0 0.0
    %1244 = vmatprep.subr.mxu0 0.0
    %1245 = vmatpush2.msra.mxu0 0.0
    %1246 = vmatprep.subr.mxu0 0.0
    %1247 = vmatpush2.msra.mxu0 0.0
    %1248 = vmatprep.subr.mxu0 0.0
    %1249 = vmatpush2.msra.mxu0 0.0
    %1250 = vmatprep.subr.mxu0 0.0
    %1251 = vmatpush2.msra.mxu0 0.0
    %1252 = vmatprep.subr.mxu0 0.0
    %1253 = vmatpush2.msra.mxu0 0.0
    %1254 = vmatprep.subr.mxu0 0.0
    %1255 = vmatpush2.msra.mxu0 0.0
    %1256 = vmatprep.subr.mxu0 0.0
    %1257 = vmatpush2.msra.mxu0 0.0
    %1258 = vmatprep.subr.mxu0 0.0
    %1259 = vmatpush2.msra.mxu0 0.0
    %1260 = vmatprep.subr.mxu0 0.0
    %1261 = vmatpush2.msra.mxu0 0.0
    %1262 = vmatprep.mubr.f32.mxu0 0.0
    %1263 = vmatmul.mubr.f32.gmra.mxu0 %v1130
    %v1264 = vpop.f32.mrf.mxu0
    %v1265 = vadd.f32 %v1186, %v1264
    %v1266 = vpop.f32.mrf.mxu0
    %v1267 = vadd.f32 %v1190, %v1266
    %1268 = vdwg.mxu0
    %1269 = vmatprep.subr.mxu0 0.0
    %1270 = vmatpush1.msra.mxu0 %v1179
    %1271 = vmatprep.subr.mxu0 0.0
    %1272 = vmatpush1.msra.mxu0 %v1176
    %1273 = vmatprep.subr.mxu0 0.0
    %1274 = vmatpush1.msra.mxu0 %v1173
    %1275 = vmatprep.subr.mxu0 0.0
    %1276 = vmatpush1.msra.mxu0 %v1170
    %1277 = vmatprep.subr.mxu0 0.0
    %1278 = vmatpush1.msra.mxu0 %v1167
    %1279 = vmatprep.subr.mxu0 0.0
    %1280 = vmatpush1.msra.mxu0 %v1164
    %1281 = vmatprep.subr.mxu0 0.0
    %1282 = vmatpush1.msra.mxu0 %v1161
    %1283 = vmatprep.subr.mxu0 0.0
    %1284 = vmatpush1.msra.mxu0 %v1158
    %1285 = vmatprep.subr.mxu0 0.0
    %1286 = vmatpush1.msra.mxu0 %v1155
    %1287 = vmatprep.subr.mxu0 0.0
    %1288 = vmatpush1.msra.mxu0 %v1152
    %1289 = vmatprep.subr.mxu0 0.0
    %1290 = vmatpush1.msra.mxu0 %v1149
    %1291 = vmatprep.subr.mxu0 0.0
    %1292 = vmatpush1.msra.mxu0 %v1146
    %1293 = vmatprep.subr.mxu0 0.0
    %1294 = vmatpush1.msra.mxu0 %v1143
    %1295 = vmatprep.subr.mxu0 0.0
    %1296 = vmatpush1.msra.mxu0 %v1140
    %1297 = vmatprep.subr.mxu0 0.0
    %1298 = vmatpush1.msra.mxu0 %v1137
    %1299 = vmatprep.subr.mxu0 0.0
    %1300 = vmatpush1.msra.mxu0 %v1134
    %1301 = vmatprep.subr.mxu0 0.0
    %1302 = vmatpush2.msra.mxu0 0.0
    %1303 = vmatprep.subr.mxu0 0.0
    %1304 = vmatpush2.msra.mxu0 0.0
    %1305 = vmatprep.subr.mxu0 0.0
    %1306 = vmatpush2.msra.mxu0 0.0
    %1307 = vmatprep.subr.mxu0 0.0
    %1308 = vmatpush2.msra.mxu0 0.0
    %1309 = vmatprep.subr.mxu0 0.0
    %1310 = vmatpush2.msra.mxu0 0.0
    %1311 = vmatprep.subr.mxu0 0.0
    %1312 = vmatpush2.msra.mxu0 0.0
    %1313 = vmatprep.subr.mxu0 0.0
    %1314 = vmatpush2.msra.mxu0 0.0
    %1315 = vmatprep.subr.mxu0 0.0
    %1316 = vmatpush2.msra.mxu0 0.0
    %1317 = vmatprep.subr.mxu0 0.0
    %1318 = vmatpush2.msra.mxu0 0.0
    %1319 = vmatprep.subr.mxu0 0.0
    %1320 = vmatpush2.msra.mxu0 0.0
    %1321 = vmatprep.subr.mxu0 0.0
    %1322 = vmatpush2.msra.mxu0 0.0
    %1323 = vmatprep.subr.mxu0 0.0
    %1324 = vmatpush2.msra.mxu0 0.0
    %1325 = vmatprep.subr.mxu0 0.0
    %1326 = vmatpush2.msra.mxu0 0.0
    %1327 = vmatprep.subr.mxu0 0.0
    %1328 = vmatpush2.msra.mxu0 0.0
    %1329 = vmatprep.subr.mxu0 0.0
    %1330 = vmatpush2.msra.mxu0 0.0
    %1331 = vmatprep.subr.mxu0 0.0
    %1332 = vmatpush2.msra.mxu0 0.0
    %1333 = vmatprep.mubr.f32.mxu0 0.0
    %1334 = vmatmul.mubr.f32.gmra.mxu0 %v1130
    %v1335 = vpop.f32.mrf.mxu0
    %v1336 = vadd.f32 %v1194, %v1335
    %v1337 = vpop.f32.mrf.mxu0
    %1338 = vdwg.mxu0
    %v1339 = vxor.u32 %v1265, 2147483648
    %v1340 = vmul.f32 %v1339, 1.442695
    %v1341 = vpow.pop %v1340
    %v1342 = vadd.f32 %v1341, 1.0
    %v1343 = vrcp.pop %v1342
    %v1344 = vmul.f32 1.0, %v1343
    %v1345 = vtanh.pop %v1267
    %v1346 = vxor.u32 %v1336, 2147483648
    %v1347 = vmul.f32 %v1346, 1.442695
    %v1348 = vpow.pop %v1347
    %v1349 = vadd.f32 %v1348, 1.0
    %v1350 = vrcp.pop %v1349
    %v1351 = vmul.f32 1.0, %v1350
    %v1352 = vmul.f32 %v1344, %v1345
    %v1353 = vtanh.pop %v1352
    %v1354 = vmul.f32 %v1351, %v1353
    %v1355 = vld [vmem:[%s5] sm:$0xff]
    %v1356 = vld [vmem:[%s5 + $0x8] sm:$0xff]
    %v1357 = vld [vmem:[%s5 + $0x10] sm:$0xff]
    %v1358 = vld [vmem:[%s5 + $0x18] sm:$0xff]
    %v1359 = vld [vmem:[%s5 + $0x20] sm:$0xff]
    %v1360 = vld [vmem:[%s5 + $0x28] sm:$0xff]
    %v1361 = vld [vmem:[%s5 + $0x30] sm:$0xff]
    %v1362 = vld [vmem:[%s5 + $0x38] sm:$0xff]
    %v1363 = vld [vmem:[%s5 + $0x40] sm:$0xff]
    %v1364 = vld [vmem:[%s5 + $0x48] sm:$0xff]
    %v1365 = vld [vmem:[%s5 + $0x50] sm:$0xff]
    %v1366 = vld [vmem:[%s5 + $0x58] sm:$0xff]
    %v1367 = vld [vmem:[%s5 + $0x60] sm:$0xff]
    %v1368 = vld [vmem:[%s5 + $0x68] sm:$0xff]
    %v1369 = vld [vmem:[%s5 + $0x70] sm:$0xff]
    %v1370 = vld [vmem:[%s5 + $0x78] sm:$0xff]
    %v1371 = vld [vmem:[#allocation2] sm:$0x1]
    %v1373 = vlaneseq
    %v1374 = vshrl.u32 %v1373, 7
    %v1375 = vsub.s32 0, %v1374
    %v1376 = vrot.slane %v1371, %v1375
    %1378 = vmatprep.subr.mxu0 0.0
    %1379 = vmatpush1.msra.mxu0 %v1370
    %1380 = vmatprep.subr.mxu0 0.0
    %1381 = vmatpush1.msra.mxu0 %v1369
    %1382 = vmatprep.subr.mxu0 0.0
    %1383 = vmatpush1.msra.mxu0 %v1368
    %1384 = vmatprep.subr.mxu0 0.0
    %1385 = vmatpush1.msra.mxu0 %v1367
    %1386 = vmatprep.subr.mxu0 0.0
    %1387 = vmatpush1.msra.mxu0 %v1366
    %1388 = vmatprep.subr.mxu0 0.0
    %1389 = vmatpush1.msra.mxu0 %v1365
    %1390 = vmatprep.subr.mxu0 0.0
    %1391 = vmatpush1.msra.mxu0 %v1364
    %1392 = vmatprep.subr.mxu0 0.0
    %1393 = vmatpush1.msra.mxu0 %v1363
    %1394 = vmatprep.subr.mxu0 0.0
    %1395 = vmatpush1.msra.mxu0 %v1362
    %1396 = vmatprep.subr.mxu0 0.0
    %1397 = vmatpush1.msra.mxu0 %v1361
    %1398 = vmatprep.subr.mxu0 0.0
    %1399 = vmatpush1.msra.mxu0 %v1360
    %1400 = vmatprep.subr.mxu0 0.0
    %1401 = vmatpush1.msra.mxu0 %v1359
    %1402 = vmatprep.subr.mxu0 0.0
    %1403 = vmatpush1.msra.mxu0 %v1358
    %1404 = vmatprep.subr.mxu0 0.0
    %1405 = vmatpush1.msra.mxu0 %v1357
    %1406 = vmatprep.subr.mxu0 0.0
    %1407 = vmatpush1.msra.mxu0 %v1356
    %1408 = vmatprep.subr.mxu0 0.0
    %1409 = vmatpush1.msra.mxu0 %v1355
    %1410 = vmatprep.subr.mxu0 0.0
    %1411 = vmatpush2.msra.mxu0 0.0
    %1412 = vmatprep.subr.mxu0 0.0
    %1413 = vmatpush2.msra.mxu0 0.0
    %1414 = vmatprep.subr.mxu0 0.0
    %1415 = vmatpush2.msra.mxu0 0.0
    %1416 = vmatprep.subr.mxu0 0.0
    %1417 = vmatpush2.msra.mxu0 0.0
    %1418 = vmatprep.subr.mxu0 0.0
    %1419 = vmatpush2.msra.mxu0 0.0
    %1420 = vmatprep.subr.mxu0 0.0
    %1421 = vmatpush2.msra.mxu0 0.0
    %1422 = vmatprep.subr.mxu0 0.0
    %1423 = vmatpush2.msra.mxu0 0.0
    %1424 = vmatprep.subr.mxu0 0.0
    %1425 = vmatpush2.msra.mxu0 0.0
    %1426 = vmatprep.subr.mxu0 0.0
    %1427 = vmatpush2.msra.mxu0 0.0
    %1428 = vmatprep.subr.mxu0 0.0
    %1429 = vmatpush2.msra.mxu0 0.0
    %1430 = vmatprep.subr.mxu0 0.0
    %1431 = vmatpush2.msra.mxu0 0.0
    %1432 = vmatprep.subr.mxu0 0.0
    %1433 = vmatpush2.msra.mxu0 0.0
    %1434 = vmatprep.subr.mxu0 0.0
    %1435 = vmatpush2.msra.mxu0 0.0
    %1436 = vmatprep.subr.mxu0 0.0
    %1437 = vmatpush2.msra.mxu0 0.0
    %1438 = vmatprep.subr.mxu0 0.0
    %1439 = vmatpush2.msra.mxu0 0.0
    %1440 = vmatprep.subr.mxu0 0.0
    %1441 = vmatpush2.msra.mxu0 0.0
    %1442 = vmatprep.mubr.f32.mxu0 0.0
    %1443 = vmatmul.mubr.f32.gmra.mxu0 %v1354
    %v1444 = vpop.f32.mrf.mxu0
    %v1445 = vadd.f32 %v1376, %v1444
    %v1446 = vpop.f32.mrf.mxu0
    %1447 = vdwg.mxu0
    %vm1448 = vcmask 7168
    %1449 = vst.msk [vmem:[%s7] sm:$0xff] %vm1448, %v1445
    // Predicated region
    $region34: #{tpu_custom_call.1} parent=1 // pred_check
      _
    $region35: #{tpu_custom_call.1} parent=1 // pred_check_branch
      %1451 = sbr.rel (0) target = $region37
    $region36: #{tpu_custom_call.1} parent=1 // pred_region
      _
    $region37: #{tpu_custom_call.1} parent=1 // pred_fallthru
      _
    // Predicated region
    $region38: #{tpu_custom_call.1} parent=1 // pred_check
      _
    $region39: #{tpu_custom_call.1} parent=1 // pred_check_branch
      %1453 = sbr.rel (0) target = $region41
    $region40: #{tpu_custom_call.1} parent=1 // pred_region
      _
    $region41: #{tpu_custom_call.1} parent=1 // pred_fallthru
      _
    %1454 = vsyncpa [#allocation4], 1

</llo_original>
